<compile_context>
chip_gen: v7x
topology: tpu7x:2x2x1
jax: 0.10.0
libtpu: 0.0.40
codegen_flags: <defaults>
</compile_context>

<pallas_src>
import math

import jax
import jax.numpy as jnp
from jax.experimental import pallas as pl
from jax.experimental.pallas import tpu as pltpu


# ---------------------------------------------------------------------------
# Kernel A: ChannelGate + ChannelPool + SpatialGate 7x7 conv (fused).
#   x_ref   : (Nb, C, HW)     activations for Nb samples
#   ct_ref  : (Nb, C, 1)      ChannelGate tab embedding (precomputed in glue)
#   st_ref  : (Nb, HW)        SpatialGate tab embedding (precomputed in glue)
#   w1/b1   : (1, C, Cr) / (1, 1, Cr)   shared MLP layer 1 (weight^T)
#   w2/b2   : (1, C, Cr) / (1, C, 1)    shared MLP layer 2
#   cm_ref  : (3, HW, HW)     dense conv matrices (max / mean / tab channels)
# outputs:
#   y_ref   : (Nb, C, HW)     channel-gated activations
#   conv_ref: (Nb, HW)        7x7 conv output (pre-BatchNorm)
# ---------------------------------------------------------------------------
def gate_conv_kernel(x_ref, ct_ref, st_ref, w1_ref, b1_ref, w2_ref, b2_ref,
                     cm_ref, y_ref, conv_ref):
    x = x_ref[...]                                   # (Nb, C, HW)
    w1 = w1_ref[...]                                 # (1, C, Cr)
    b1 = b1_ref[...]                                 # (1, 1, Cr)

    # --- ChannelGate: pooled descriptors, each (Nb, C, 1) -------------------
    avg_p = jnp.mean(x, axis=2, keepdims=True)
    max_p = jnp.max(x, axis=2, keepdims=True)
    tab_p = ct_ref[...]

    # Shared MLP, batched over samples.  ReLU is per pool-type, but the second
    # layer is linear, so it is applied once to the summed hidden activations.
    def hidden(p):                                   # (Nb, C, 1) -> (Nb, 1, Cr)
        h = jnp.sum(p * w1, axis=1, keepdims=True) + b1
        return jnp.maximum(h, 0.0)

    h_sum = hidden(avg_p) + hidden(max_p) + hidden(tab_p)            # (Nb, 1, Cr)
    att = (jnp.sum(w2_ref[...] * h_sum, axis=2, keepdims=True)
           + 3.0 * b2_ref[...])                                      # (Nb, C, 1)
    y = x * jax.nn.sigmoid(att)                                      # (Nb, C, HW)
    y_ref[...] = y

    # --- ChannelPool (in VMEM only) + 7x7 conv as dense MXU matmuls ---------
    cmax = jnp.max(y, axis=1)                                        # (Nb, HW)
    cmean = jnp.mean(y, axis=1)                                      # (Nb, HW)
    conv_ref[...] = (
        jnp.dot(cmax, cm_ref[0], preferred_element_type=jnp.float32)
        + jnp.dot(cmean, cm_ref[1], preferred_element_type=jnp.float32)
        + jnp.dot(st_ref[...], cm_ref[2], preferred_element_type=jnp.float32))


# ---------------------------------------------------------------------------
# Kernel B: spatial sigmoid scale + per-sample temporal avg/max pools.
#   y_ref  : (Nb, C, HW), bn_ref : (Nb, 1, HW)  (pre-sigmoid BN output)
#   o_ref  : (Nb, C, HW), tavg/tmax : (Nb, 1, 1)
# ---------------------------------------------------------------------------
def scale_pool_kernel(y_ref, bn_ref, o_ref, tavg_ref, tmax_ref):
    y = y_ref[...] * jax.nn.sigmoid(bn_ref[...])     # (Nb,C,HW) * (Nb,1,HW)
    o_ref[...] = y
    tavg_ref[...] = jnp.mean(jnp.mean(y, axis=2, keepdims=True),
                             axis=1, keepdims=True)  # (Nb, 1, 1)
    tmax_ref[...] = jnp.max(jnp.max(y, axis=2, keepdims=True),
                            axis=1, keepdims=True)   # (Nb, 1, 1)


# ---------------------------------------------------------------------------
# Dense matrix form of the 7x7 "SAME" conv (3 in-channels -> 1 out-channel):
#   conv[n, yo*W+xo] = sum_c  in_c[n, :] @ M[c]       with
#   M[c, yi*W+xi, yo*W+xo] = w[c, yi-yo+3, xi-xo+3]   (0 outside the kernel).
# Built once in glue from the (1, 3, 7, 7) conv weight.
# ---------------------------------------------------------------------------
def build_conv_matrix(conv_w, H, W):
    w = conv_w[0]                                        # (3, 7, 7)
    yi = jnp.arange(H)
    xi = jnp.arange(W)
    ky = yi[:, None] - yi[None, :] + 3                   # (yi, yo)
    kx = xi[:, None] - xi[None, :] + 3                   # (xi, xo)
    valid = (ky[:, :, None, None] >= 0) & (ky[:, :, None, None] < 7) & \
            (kx[None, None, :, :] >= 0) & (kx[None, None, :, :] < 7)
    kyc = jnp.clip(ky, 0, 6)
    kxc = jnp.clip(kx, 0, 6)
    wfull = w[:, kyc[:, :, None, None], kxc[None, None, :, :]]   # (3,H,Ho,W,Wo)
    wfull = jnp.where(valid[None], wfull, 0.0)
    m = jnp.transpose(wfull, (0, 1, 3, 2, 4)).reshape(3, H * W, H * W)
    return m.astype(jnp.float32)


# ---------------------------------------------------------------------------
# Parameters (deterministic init; shapes follow the PyTorch module)
# ---------------------------------------------------------------------------
def make_params(key, C, H, W, Fr, TD):
    Cr = max(C // 16, 1)
    HW = H * W
    ks = jax.random.split(key, 24)

    def nrm(k, shape, s=0.2):
        return s * jax.random.normal(k, shape, jnp.float32)

    p = {}
    # ChannelGate.mlp : Linear(C, Cr) -> ReLU -> Linear(Cr, C)
    p['m_w1'], p['m_b1'] = nrm(ks[0], (Cr, C)), nrm(ks[1], (Cr,))
    p['m_w2'], p['m_b2'] = nrm(ks[2], (C, Cr)), nrm(ks[3], (C,))
    # ChannelGate.tab_embedding : Linear(TD, Cr) -> ReLU -> Linear(Cr, C)
    p['ct_w1'], p['ct_b1'] = nrm(ks[4], (Cr, TD)), nrm(ks[5], (Cr,))
    p['ct_w2'], p['ct_b2'] = nrm(ks[6], (C, Cr)), nrm(ks[7], (C,))
    # SpatialGate.tab_embedding : Linear(TD, HW/2) -> ReLU -> Linear(HW/2, HW)
    p['st_w1'], p['st_b1'] = nrm(ks[8], (HW // 2, TD)), nrm(ks[9], (HW // 2,))
    p['st_w2'], p['st_b2'] = nrm(ks[10], (HW, HW // 2)), nrm(ks[11], (HW,))
    # SpatialGate.spatial : Conv2d(3, 1, 7, padding=3, bias=False) + BN(1)
    p['conv_w'] = nrm(ks[12], (1, 3, 7, 7))
    p['bn_w'], p['bn_b'] = jnp.float32(1.0), jnp.float32(0.0)
    # TemporalGate.tab_embedding : Linear(TD, Fr/2) -> ReLU -> Linear(Fr/2, Fr)
    p['tt_w1'], p['tt_b1'] = nrm(ks[13], (Fr // 2, TD)), nrm(ks[14], (Fr // 2,))
    p['tt_w2'], p['tt_b2'] = nrm(ks[15], (Fr, Fr // 2)), nrm(ks[16], (Fr,))
    # TemporalMHSA : qkv Linear(3, 12), rel (1,1,Fr,1), o_proj Linear(4, 1)
    p['qkv_w'], p['qkv_b'] = nrm(ks[17], (12, 3)), nrm(ks[18], (12,))
    p['rel'] = jax.random.normal(ks[19], (1, 1, Fr, 1), jnp.float32)
    p['o_w'], p['o_b'] = nrm(ks[20], (1, 4)), nrm(ks[21], (1,))
    return p


def temporal_mhsa(x, params):
    # x : (b, Fr, 3)   -- tiny 4-token attention, plain JAX glue.
    b_, f_, _ = x.shape
    heads, emb = 2, 4
    hd = emb // heads
    qkv = x @ params['qkv_w'].T + params['qkv_b']                   # (b, f, 12)
    qkv = qkv.reshape(b_, f_, heads, 3 * hd).transpose(0, 2, 1, 3)  # (b, h, f, 6)
    q, k, v = jnp.split(qkv, 3, axis=-1)                            # (b, h, f, hd)
    k = k + params['rel']                                           # (1,1,f,1)
    logits = jnp.einsum('bhqd,bhkd->bhqk', q, k) / math.sqrt(hd)
    attn = jax.nn.softmax(logits, axis=-1)
    vals = jnp.einsum('bhqk,bhkd->bhqd', attn, v)
    vals = vals.transpose(0, 2, 1, 3).reshape(b_, f_, emb)
    return vals @ params['o_w'].T + params['o_b']                   # (b, f, 1)


# ---------------------------------------------------------------------------
# Full forward pass (2 Pallas kernels + small JAX glue)
# ---------------------------------------------------------------------------
def tab_attention_forward(params, x, tab):
    b, C, H, W, Fr = x.shape
    TD = tab.shape[-1]
    HW = H * W
    N = b * Fr
    Cr = max(C // 16, 1)
    f32 = jnp.float32

    NBLK = 2 if (N % 2 == 0 and N >= 2) else 1      # >=2 steps so v7x can split
    Nb = N // NBLK

    # (b, C, H, W, Fr) -> (b, Fr, C, H, W) -> (N, C, HW), with n = b_idx*Fr + f_idx
    x_in = jnp.transpose(x, (0, 4, 1, 2, 3)).reshape(N, C, HW).astype(f32)

    # torch: tab.repeat(f, 1, 1) => row n pairs with tab[n % b] (kept as-is).
    tab_rep = jnp.tile(tab.reshape(b, TD), (Fr, 1)).astype(f32)        # (N, TD)

    # Tiny tab MLPs (glue): ChannelGate.tab_embedding / SpatialGate.tab_embedding.
    ct_emb = (jax.nn.relu(tab_rep @ params['ct_w1'].T + params['ct_b1'])
              @ params['ct_w2'].T + params['ct_b2'])                    # (N, C)
    st_emb = (jax.nn.relu(tab_rep @ params['st_w1'].T + params['st_b1'])
              @ params['st_w2'].T + params['st_b2'])                    # (N, HW)

    conv_m = build_conv_matrix(params['conv_w'], H, W)                  # (3, HW, HW)

    x4 = x_in.reshape(NBLK, Nb, C, HW)
    ct4 = ct_emb.astype(f32).reshape(NBLK, Nb, C, 1)
    st4 = st_emb.astype(f32).reshape(NBLK, Nb, HW)

    # Shared-MLP weights pre-shaped in glue so the kernel never reshapes.
    w1b = params['m_w1'].T.reshape(1, C, Cr)
    b1b = params['m_b1'].reshape(1, 1, Cr)
    w2b = params['m_w2'].reshape(1, C, Cr)
    b2b = params['m_b2'].reshape(1, C, 1)

    cp = pltpu.CompilerParams(
        dimension_semantics=("parallel",),
        vmem_limit_bytes=32 * 1024 * 1024)   # explicit budget (safe on v5e..v7x)

    # ---- Kernel A: channel gate + channel pool + 7x7 conv -------------------
    y4, conv4 = pl.pallas_call(
        gate_conv_kernel,
        grid=(NBLK,),
        in_specs=[
            pl.BlockSpec((None, Nb, C, HW), lambda i: (i, 0, 0, 0)),
            pl.BlockSpec((None, Nb, C, 1), lambda i: (i, 0, 0, 0)),
            pl.BlockSpec((None, Nb, HW), lambda i: (i, 0, 0)),
            pl.BlockSpec((1, C, Cr), lambda i: (0, 0, 0)),
            pl.BlockSpec((1, 1, Cr), lambda i: (0, 0, 0)),
            pl.BlockSpec((1, C, Cr), lambda i: (0, 0, 0)),
            pl.BlockSpec((1, C, 1), lambda i: (0, 0, 0)),
            pl.BlockSpec((3, HW, HW), lambda i: (0, 0, 0)),
        ],
        out_specs=[
            pl.BlockSpec((None, Nb, C, HW), lambda i: (i, 0, 0, 0)),
            pl.BlockSpec((None, Nb, HW), lambda i: (i, 0, 0)),
        ],
        out_shape=[
            jax.ShapeDtypeStruct((NBLK, Nb, C, HW), f32),
            jax.ShapeDtypeStruct((NBLK, Nb, HW), f32),
        ],
        compiler_params=cp,
    )(x4, ct4, st4, w1b, b1b, w2b, b2b, conv_m)

    # BatchNorm2d (training-mode batch statistics over the whole N*H*W slab of
    # the single conv channel, matching a freshly constructed torch module).
    conv_flat = conv4.reshape(N, HW)
    mu = jnp.mean(conv_flat)
    var = jnp.mean(jnp.square(conv_flat - mu))
    bn = ((conv_flat - mu) / jnp.sqrt(var + 1e-5)) * params['bn_w'] + params['bn_b']
    bn4 = bn.reshape(NBLK, Nb, 1, HW)

    # ---- Kernel B: spatial sigmoid scale + temporal avg/max pools -----------
    y2_4, tavg4, tmax4 = pl.pallas_call(
        scale_pool_kernel,
        grid=(NBLK,),
        in_specs=[
            pl.BlockSpec((None, Nb, C, HW), lambda i: (i, 0, 0, 0)),
            pl.BlockSpec((None, Nb, 1, HW), lambda i: (i, 0, 0, 0)),
        ],
        out_specs=[
            pl.BlockSpec((None, Nb, C, HW), lambda i: (i, 0, 0, 0)),
            pl.BlockSpec((None, Nb, 1, 1), lambda i: (i, 0, 0, 0)),
            pl.BlockSpec((None, Nb, 1, 1), lambda i: (i, 0, 0, 0)),
        ],
        out_shape=[
            jax.ShapeDtypeStruct((NBLK, Nb, C, HW), f32),
            jax.ShapeDtypeStruct((NBLK, Nb, 1, 1), f32),
            jax.ShapeDtypeStruct((NBLK, Nb, 1, 1), f32),
        ],
        compiler_params=cp,
    )(y4, bn4)

    # ---- TemporalGate: tab embedding + tiny MHSA (glue) ---------------------
    tt_emb = (jax.nn.relu(tab.reshape(b, TD) @ params['tt_w1'].T + params['tt_b1'])
              @ params['tt_w2'].T + params['tt_b2'])                    # (b, Fr)
    concat = jnp.stack([tavg4.reshape(b, Fr), tmax4.reshape(b, Fr), tt_emb],
                       axis=2)                                          # (b, Fr, 3)
    t_scale = jax.nn.sigmoid(temporal_mhsa(concat, params))             # (b, Fr, 1)

    # Temporal scale (per-sample scalar) + final permute left to XLA so the
    # broadcast multiply fuses into the transpose (no extra kernel launch).
    y5 = y2_4.reshape(b, Fr, C, H, W) * t_scale[:, :, :, None, None]
    return jnp.transpose(y5, (0, 2, 3, 4, 1))


# ---------------------------------------------------------------------------
# Pure-JAX reference (mirrors the PyTorch forward) for validation
# ---------------------------------------------------------------------------
def tab_attention_reference(params, x, tab):
    b, C, H, W, Fr = x.shape
    TD = tab.shape[-1]
    N = b * Fr
    x_in = jnp.transpose(x, (0, 4, 1, 2, 3)).reshape(N, C, H, W)
    tab_rep = jnp.tile(tab.reshape(b, TD), (Fr, 1))

    def mlp(v):
        h = jax.nn.relu(v @ params['m_w1'].T + params['m_b1'])
        return h @ params['m_w2'].T + params['m_b2']

    avg = jnp.mean(x_in, axis=(2, 3))
    mx = jnp.max(x_in, axis=(2, 3))
    ct = (jax.nn.relu(tab_rep @ params['ct_w1'].T + params['ct_b1'])
          @ params['ct_w2'].T + params['ct_b2'])
    att = mlp(avg) + mlp(mx) + mlp(ct)
    x1 = x_in * jax.nn.sigmoid(att)[:, :, None, None]

    cmax = jnp.max(x1, axis=1, keepdims=True)
    cmean = jnp.mean(x1, axis=1, keepdims=True)
    st = (jax.nn.relu(tab_rep @ params['st_w1'].T + params['st_b1'])
          @ params['st_w2'].T + params['st_b2'])
    comp = jnp.concatenate([cmax, cmean, st.reshape(N, 1, H, W)], axis=1)
    conv = jax.lax.conv_general_dilated(
        comp, params['conv_w'], window_strides=(1, 1), padding='SAME',
        dimension_numbers=('NCHW', 'OIHW', 'NCHW'))
    mu = jnp.mean(conv)
    var = jnp.mean((conv - mu) ** 2)
    bn = (conv - mu) / jnp.sqrt(var + 1e-5) * params['bn_w'] + params['bn_b']
    x2 = x1 * jax.nn.sigmoid(bn)

    x5 = x2.reshape(b, Fr, C, H, W)
    tavg = jnp.mean(x5, axis=(2, 3, 4))
    tmax = jnp.max(x5, axis=(2, 3, 4))
    tt = (jax.nn.relu(tab.reshape(b, TD) @ params['tt_w1'].T + params['tt_b1'])
          @ params['tt_w2'].T + params['tt_b2'])
    concat = jnp.stack([tavg, tmax, tt], axis=2)
    ts = jax.nn.sigmoid(temporal_mhsa(concat, params))
    x6 = x5 * ts[:, :, :, None, None]
    return jnp.transpose(x6, (0, 2, 3, 4, 1))


if __name__ == "__main__":
    key = jax.random.PRNGKey(0)
    b, C, H, W, Fr, TD = 2, 16, 8, 8, 4, 6
    kx, kt, kp = jax.random.split(key, 3)
    x = jax.random.normal(kx, (b, C, H, W, Fr), jnp.float32)
    tab = jax.random.normal(kt, (b, 1, TD), jnp.float32)
    params = make_params(kp, C, H, W, Fr, TD)

    fwd = jax.jit(tab_attention_forward)
    out = jax.block_until_ready(fwd(params, x, tab))
    ref = jax.block_until_ready(tab_attention_reference(params, x, tab))

    assert out.shape == (b, C, H, W, Fr), out.shape
    max_err = float(jnp.max(jnp.abs(out - ref)))
    if max_err > 1e-3:
        raise AssertionError(f"Pallas/reference mismatch, max abs err {max_err}")
    print("KERNEL_OK")
</pallas_src>

<mosaic_0001>
module attributes {stable_mosaic.version = 11 : i64} {
  func.func @gate_conv_kernel(%arg0: i32, %arg1: memref<1x4x16x64xf32, #tpu.memory_space<vmem>>, %arg2: memref<1x4x16x1xf32, #tpu.memory_space<vmem>>, %arg3: memref<1x4x64xf32, #tpu.memory_space<vmem>>, %arg4: memref<1x16x1xf32, #tpu.memory_space<vmem>>, %arg5: memref<1x1x1xf32, #tpu.memory_space<vmem>>, %arg6: memref<1x16x1xf32, #tpu.memory_space<vmem>>, %arg7: memref<1x16x1xf32, #tpu.memory_space<vmem>>, %arg8: memref<3x64x64xf32, #tpu.memory_space<vmem>>, %arg9: memref<1x4x16x64xf32, #tpu.memory_space<vmem>>, %arg10: memref<1x4x64xf32, #tpu.memory_space<vmem>>) attributes {dimension_semantics = [#tpu.dimension_semantics<parallel>], iteration_bounds = array<i64: 2>, scalar_prefetch = 0 : i64, scratch_operands = 0 : i64, tpu.core_type = #tpu.core_type<tc>, window_params = [{transform_indices = @transform_0, window_bounds = array<i64: 1, 4, 16, 64>}, {transform_indices = @transform_1, window_bounds = array<i64: 1, 4, 16, 1>}, {transform_indices = @transform_2, window_bounds = array<i64: 1, 4, 64>}, {pipeline_mode = #tpu.pipeline_mode<synchronous>, transform_indices = @transform_3, window_bounds = array<i64: 1, 16, 1>}, {pipeline_mode = #tpu.pipeline_mode<synchronous>, transform_indices = @transform_4, window_bounds = array<i64: 1, 1, 1>}, {pipeline_mode = #tpu.pipeline_mode<synchronous>, transform_indices = @transform_5, window_bounds = array<i64: 1, 16, 1>}, {pipeline_mode = #tpu.pipeline_mode<synchronous>, transform_indices = @transform_6, window_bounds = array<i64: 1, 16, 1>}, {pipeline_mode = #tpu.pipeline_mode<synchronous>, transform_indices = @transform_7, window_bounds = array<i64: 3, 64, 64>}, {transform_indices = @transform_8, window_bounds = array<i64: 1, 4, 16, 64>}, {transform_indices = @transform_9, window_bounds = array<i64: 1, 4, 64>}]} {
    %c0 = arith.constant 0 : index
    %c0_0 = arith.constant 0 : index
    %c0_1 = arith.constant 0 : index
    %c0_2 = arith.constant 0 : index
    %0 = vector.load %arg1[%c0, %c0_0, %c0_1, %c0_2] : memref<1x4x16x64xf32, #tpu.memory_space<vmem>>, vector<1x4x16x64xf32>
    %1 = vector.shape_cast %0 : vector<1x4x16x64xf32> to vector<4x16x64xf32>
    %c0_3 = arith.constant 0 : index
    %c0_4 = arith.constant 0 : index
    %c0_5 = arith.constant 0 : index
    %2 = vector.load %arg4[%c0_3, %c0_4, %c0_5] : memref<1x16x1xf32, #tpu.memory_space<vmem>>, vector<1x16x1xf32>
    %c0_6 = arith.constant 0 : index
    %c0_7 = arith.constant 0 : index
    %c0_8 = arith.constant 0 : index
    %3 = vector.load %arg5[%c0_6, %c0_7, %c0_8] : memref<1x1x1xf32, #tpu.memory_space<vmem>>, vector<1x1x1xf32>
    %cst = arith.constant dense<0.000000e+00> : vector<4x16xf32>
    %4 = vector.multi_reduction <add>, %1, %cst [2] : vector<4x16x64xf32> to vector<4x16xf32>
    %5 = vector.shape_cast %4 : vector<4x16xf32> to vector<4x16x1xf32>
    %cst_9 = arith.constant 6.400000e+01 : f32
    %6 = vector.broadcast %cst_9 : f32 to vector<4x16x1xf32>
    %7 = arith.divf %5, %6 : vector<4x16x1xf32>
    %cst_10 = arith.constant dense<0xFF800000> : vector<4x16xf32>
    %8 = vector.multi_reduction <maximumf>, %1, %cst_10 [2] : vector<4x16x64xf32> to vector<4x16xf32>
    %9 = vector.shape_cast %8 : vector<4x16xf32> to vector<4x16x1xf32>
    %c0_11 = arith.constant 0 : index
    %c0_12 = arith.constant 0 : index
    %c0_13 = arith.constant 0 : index
    %c0_14 = arith.constant 0 : index
    %10 = vector.load %arg2[%c0_11, %c0_12, %c0_13, %c0_14] : memref<1x4x16x1xf32, #tpu.memory_space<vmem>>, vector<1x4x16x1xf32>
    %11 = vector.shape_cast %10 : vector<1x4x16x1xf32> to vector<4x16x1xf32>
    %12 = vector.broadcast %2 : vector<1x16x1xf32> to vector<4x16x1xf32>
    %13 = arith.mulf %7, %12 : vector<4x16x1xf32>
    %cst_15 = arith.constant dense<0.000000e+00> : vector<4x1xf32>
    %14 = vector.multi_reduction <add>, %13, %cst_15 [1] : vector<4x16x1xf32> to vector<4x1xf32>
    %15 = vector.shape_cast %14 : vector<4x1xf32> to vector<4x1x1xf32>
    %16 = vector.broadcast %3 : vector<1x1x1xf32> to vector<4x1x1xf32>
    %17 = arith.addf %15, %16 : vector<4x1x1xf32>
    %cst_16 = arith.constant 0.000000e+00 : f32
    %18 = vector.broadcast %cst_16 : f32 to vector<4x1x1xf32>
    %19 = arith.maximumf %17, %18 : vector<4x1x1xf32>
    %20 = vector.broadcast %2 : vector<1x16x1xf32> to vector<4x16x1xf32>
    %21 = arith.mulf %9, %20 : vector<4x16x1xf32>
    %cst_17 = arith.constant dense<0.000000e+00> : vector<4x1xf32>
    %22 = vector.multi_reduction <add>, %21, %cst_17 [1] : vector<4x16x1xf32> to vector<4x1xf32>
    %23 = vector.shape_cast %22 : vector<4x1xf32> to vector<4x1x1xf32>
    %24 = vector.broadcast %3 : vector<1x1x1xf32> to vector<4x1x1xf32>
    %25 = arith.addf %23, %24 : vector<4x1x1xf32>
    %cst_18 = arith.constant 0.000000e+00 : f32
    %26 = vector.broadcast %cst_18 : f32 to vector<4x1x1xf32>
    %27 = arith.maximumf %25, %26 : vector<4x1x1xf32>
    %28 = arith.addf %19, %27 : vector<4x1x1xf32>
    %29 = vector.broadcast %2 : vector<1x16x1xf32> to vector<4x16x1xf32>
    %30 = arith.mulf %11, %29 : vector<4x16x1xf32>
    %cst_19 = arith.constant dense<0.000000e+00> : vector<4x1xf32>
    %31 = vector.multi_reduction <add>, %30, %cst_19 [1] : vector<4x16x1xf32> to vector<4x1xf32>
    %32 = vector.shape_cast %31 : vector<4x1xf32> to vector<4x1x1xf32>
    %33 = vector.broadcast %3 : vector<1x1x1xf32> to vector<4x1x1xf32>
    %34 = arith.addf %32, %33 : vector<4x1x1xf32>
    %cst_20 = arith.constant 0.000000e+00 : f32
    %35 = vector.broadcast %cst_20 : f32 to vector<4x1x1xf32>
    %36 = arith.maximumf %34, %35 : vector<4x1x1xf32>
    %37 = arith.addf %28, %36 : vector<4x1x1xf32>
    %c0_21 = arith.constant 0 : index
    %c0_22 = arith.constant 0 : index
    %c0_23 = arith.constant 0 : index
    %38 = vector.load %arg6[%c0_21, %c0_22, %c0_23] : memref<1x16x1xf32, #tpu.memory_space<vmem>>, vector<1x16x1xf32>
    %39 = vector.broadcast %38 : vector<1x16x1xf32> to vector<4x16x1xf32>
    %40 = vector.broadcast %37 : vector<4x1x1xf32> to vector<4x16x1xf32>
    %41 = arith.mulf %39, %40 : vector<4x16x1xf32>
    %cst_24 = arith.constant dense<0.000000e+00> : vector<4x16xf32>
    %42 = vector.multi_reduction <add>, %41, %cst_24 [2] : vector<4x16x1xf32> to vector<4x16xf32>
    %43 = vector.shape_cast %42 : vector<4x16xf32> to vector<4x16x1xf32>
    %c0_25 = arith.constant 0 : index
    %c0_26 = arith.constant 0 : index
    %c0_27 = arith.constant 0 : index
    %44 = vector.load %arg7[%c0_25, %c0_26, %c0_27] : memref<1x16x1xf32, #tpu.memory_space<vmem>>, vector<1x16x1xf32>
    %cst_28 = arith.constant 3.000000e+00 : f32
    %45 = vector.broadcast %cst_28 : f32 to vector<1x16x1xf32>
    %46 = arith.mulf %45, %44 : vector<1x16x1xf32>
    %47 = vector.broadcast %46 : vector<1x16x1xf32> to vector<4x16x1xf32>
    %48 = arith.addf %43, %47 : vector<4x16x1xf32>
    %49 = arith.negf %48 : vector<4x16x1xf32>
    %50 = math.exp %49 : vector<4x16x1xf32>
    %cst_29 = arith.constant 1.000000e+00 : f32
    %51 = vector.broadcast %cst_29 : f32 to vector<4x16x1xf32>
    %52 = arith.addf %51, %50 : vector<4x16x1xf32>
    %53 = arith.divf %51, %52 : vector<4x16x1xf32>
    %54 = vector.broadcast %53 : vector<4x16x1xf32> to vector<4x16x64xf32>
    %55 = arith.mulf %1, %54 : vector<4x16x64xf32>
    %c0_30 = arith.constant 0 : index
    %c0_31 = arith.constant 0 : index
    %c0_32 = arith.constant 0 : index
    %c0_33 = arith.constant 0 : index
    %56 = vector.load %arg9[%c0_30, %c0_31, %c0_32, %c0_33] : memref<1x4x16x64xf32, #tpu.memory_space<vmem>>, vector<1x4x16x64xf32>
    %57 = vector.shape_cast %56 : vector<1x4x16x64xf32> to vector<4x16x64xf32>
    %58 = vector.shape_cast %55 : vector<4x16x64xf32> to vector<1x4x16x64xf32>
    tpu.vector_store %arg9[%c0_30, %c0_31, %c0_32, %c0_33], %58 {strides = array<i32>} : memref<1x4x16x64xf32, #tpu.memory_space<vmem>>, vector<1x4x16x64xf32>,
    %cst_34 = arith.constant dense<0xFF800000> : vector<4x64xf32>
    %59 = vector.multi_reduction <maximumf>, %55, %cst_34 [1] : vector<4x16x64xf32> to vector<4x64xf32>
    %cst_35 = arith.constant dense<0.000000e+00> : vector<4x64xf32>
    %60 = vector.multi_reduction <add>, %55, %cst_35 [1] : vector<4x16x64xf32> to vector<4x64xf32>
    %cst_36 = arith.constant 1.600000e+01 : f32
    %61 = vector.broadcast %cst_36 : f32 to vector<4x64xf32>
    %62 = arith.divf %60, %61 : vector<4x64xf32>
    %c0_37 = arith.constant 0 : index
    %c0_38 = arith.constant 0 : index
    %c0_39 = arith.constant 0 : index
    %63 = vector.load %arg8[%c0_37, %c0_38, %c0_39] : memref<3x64x64xf32, #tpu.memory_space<vmem>>, vector<1x64x64xf32>
    %64 = vector.shape_cast %63 : vector<1x64x64xf32> to vector<64x64xf32>
    %cst_40 = arith.constant dense<0.000000e+00> : vector<4x64xf32>
    %65 = tpu.matmul %59, %64, %cst_40 {dimension_numbers = #tpu.dot_dimension_numbers<[1], [0], [0], [1], [0, 0, 1, 1], [], []>} : vector<4x64xf32>, vector<64x64xf32>, vector<4x64xf32> -> vector<4x64xf32>
    %c1 = arith.constant 1 : index
    %c0_41 = arith.constant 0 : index
    %c0_42 = arith.constant 0 : index
    %66 = vector.load %arg8[%c1, %c0_41, %c0_42] : memref<3x64x64xf32, #tpu.memory_space<vmem>>, vector<1x64x64xf32>
    %67 = vector.shape_cast %66 : vector<1x64x64xf32> to vector<64x64xf32>
    %cst_43 = arith.constant dense<0.000000e+00> : vector<4x64xf32>
    %68 = tpu.matmul %62, %67, %cst_43 {dimension_numbers = #tpu.dot_dimension_numbers<[1], [0], [0], [1], [0, 0, 1, 1], [], []>} : vector<4x64xf32>, vector<64x64xf32>, vector<4x64xf32> -> vector<4x64xf32>
    %69 = arith.addf %65, %68 : vector<4x64xf32>
    %c0_44 = arith.constant 0 : index
    %c0_45 = arith.constant 0 : index
    %c0_46 = arith.constant 0 : index
    %70 = vector.load %arg3[%c0_44, %c0_45, %c0_46] : memref<1x4x64xf32, #tpu.memory_space<vmem>>, vector<1x4x64xf32>
    %71 = vector.shape_cast %70 : vector<1x4x64xf32> to vector<4x64xf32>
    %c2 = arith.constant 2 : index
    %c0_47 = arith.constant 0 : index
    %c0_48 = arith.constant 0 : index
    %72 = vector.load %arg8[%c2, %c0_47, %c0_48] : memref<3x64x64xf32, #tpu.memory_space<vmem>>, vector<1x64x64xf32>
    %73 = vector.shape_cast %72 : vector<1x64x64xf32> to vector<64x64xf32>
    %cst_49 = arith.constant dense<0.000000e+00> : vector<4x64xf32>
    %74 = tpu.matmul %71, %73, %cst_49 {dimension_numbers = #tpu.dot_dimension_numbers<[1], [0], [0], [1], [0, 0, 1, 1], [], []>} : vector<4x64xf32>, vector<64x64xf32>, vector<4x64xf32> -> vector<4x64xf32>
    %75 = arith.addf %69, %74 : vector<4x64xf32>
    %c0_50 = arith.constant 0 : index
    %c0_51 = arith.constant 0 : index
    %c0_52 = arith.constant 0 : index
    %76 = vector.load %arg10[%c0_50, %c0_51, %c0_52] : memref<1x4x64xf32, #tpu.memory_space<vmem>>, vector<1x4x64xf32>
    %77 = vector.shape_cast %76 : vector<1x4x64xf32> to vector<4x64xf32>
    %78 = vector.shape_cast %75 : vector<4x64xf32> to vector<1x4x64xf32>
    tpu.vector_store %arg10[%c0_50, %c0_51, %c0_52], %78 {strides = array<i32>} : memref<1x4x64xf32, #tpu.memory_space<vmem>>, vector<1x4x64xf32>,
    return
  }
  func.func @transform_0(%arg0: i32) -> (i32, i32, i32, i32) {
    %c0_i32 = arith.constant 0 : i32
    %c0_i32_0 = arith.constant 0 : i32
    %c0_i32_1 = arith.constant 0 : i32
    %c0_i32_2 = arith.constant 0 : i32
    return %arg0, %c0_i32, %c0_i32_0, %c0_i32_1 : i32, i32, i32, i32
  }
  func.func @transform_1(%arg0: i32) -> (i32, i32, i32, i32) {
    %c0_i32 = arith.constant 0 : i32
    %c0_i32_0 = arith.constant 0 : i32
    %c0_i32_1 = arith.constant 0 : i32
    %c0_i32_2 = arith.constant 0 : i32
    return %arg0, %c0_i32, %c0_i32_0, %c0_i32_1 : i32, i32, i32, i32
  }
  func.func @transform_2(%arg0: i32) -> (i32, i32, i32) {
    %c0_i32 = arith.constant 0 : i32
    %c0_i32_0 = arith.constant 0 : i32
    %c0_i32_1 = arith.constant 0 : i32
    return %arg0, %c0_i32, %c0_i32_0 : i32, i32, i32
  }
  func.func @transform_3(%arg0: i32) -> (i32, i32, i32) {
    %c0_i32 = arith.constant 0 : i32
    %c0_i32_0 = arith.constant 0 : i32
    %c0_i32_1 = arith.constant 0 : i32
    %c0_i32_2 = arith.constant 0 : i32
    return %c0_i32, %c0_i32_0, %c0_i32_1 : i32, i32, i32
  }
  func.func @transform_4(%arg0: i32) -> (i32, i32, i32) {
    %c0_i32 = arith.constant 0 : i32
    %c0_i32_0 = arith.constant 0 : i32
    %c0_i32_1 = arith.constant 0 : i32
    %c0_i32_2 = arith.constant 0 : i32
    return %c0_i32, %c0_i32_0, %c0_i32_1 : i32, i32, i32
  }
  func.func @transform_5(%arg0: i32) -> (i32, i32, i32) {
    %c0_i32 = arith.constant 0 : i32
    %c0_i32_0 = arith.constant 0 : i32
    %c0_i32_1 = arith.constant 0 : i32
    %c0_i32_2 = arith.constant 0 : i32
    return %c0_i32, %c0_i32_0, %c0_i32_1 : i32, i32, i32
  }
  func.func @transform_6(%arg0: i32) -> (i32, i32, i32) {
    %c0_i32 = arith.constant 0 : i32
    %c0_i32_0 = arith.constant 0 : i32
    %c0_i32_1 = arith.constant 0 : i32
    %c0_i32_2 = arith.constant 0 : i32
    return %c0_i32, %c0_i32_0, %c0_i32_1 : i32, i32, i32
  }
  func.func @transform_7(%arg0: i32) -> (i32, i32, i32) {
    %c0_i32 = arith.constant 0 : i32
    %c0_i32_0 = arith.constant 0 : i32
    %c0_i32_1 = arith.constant 0 : i32
    %c0_i32_2 = arith.constant 0 : i32
    return %c0_i32, %c0_i32_0, %c0_i32_1 : i32, i32, i32
  }
  func.func @transform_8(%arg0: i32) -> (i32, i32, i32, i32) {
    %c0_i32 = arith.constant 0 : i32
    %c0_i32_0 = arith.constant 0 : i32
    %c0_i32_1 = arith.constant 0 : i32
    %c0_i32_2 = arith.constant 0 : i32
    return %arg0, %c0_i32, %c0_i32_0, %c0_i32_1 : i32, i32, i32, i32
  }
  func.func @transform_9(%arg0: i32) -> (i32, i32, i32) {
    %c0_i32 = arith.constant 0 : i32
    %c0_i32_0 = arith.constant 0 : i32
    %c0_i32_1 = arith.constant 0 : i32
    return %arg0, %c0_i32, %c0_i32_0 : i32, i32, i32
  }
}

module attributes {stable_mosaic.version = 11 : i64} {
  func.func @scale_pool_kernel(%arg0: i32, %arg1: memref<1x4x16x64xf32, #tpu.memory_space<vmem>>, %arg2: memref<1x4x1x64xf32, #tpu.memory_space<vmem>>, %arg3: memref<1x4x16x64xf32, #tpu.memory_space<vmem>>, %arg4: memref<1x4x1x1xf32, #tpu.memory_space<vmem>>, %arg5: memref<1x4x1x1xf32, #tpu.memory_space<vmem>>) attributes {dimension_semantics = [#tpu.dimension_semantics<parallel>], iteration_bounds = array<i64: 2>, scalar_prefetch = 0 : i64, scratch_operands = 0 : i64, tpu.core_type = #tpu.core_type<tc>, window_params = [{transform_indices = @transform_0, window_bounds = array<i64: 1, 4, 16, 64>}, {transform_indices = @transform_1, window_bounds = array<i64: 1, 4, 1, 64>}, {transform_indices = @transform_2, window_bounds = array<i64: 1, 4, 16, 64>}, {transform_indices = @transform_3, window_bounds = array<i64: 1, 4, 1, 1>}, {transform_indices = @transform_4, window_bounds = array<i64: 1, 4, 1, 1>}]} {
    %c0 = arith.constant 0 : index
    %c0_0 = arith.constant 0 : index
    %c0_1 = arith.constant 0 : index
    %c0_2 = arith.constant 0 : index
    %0 = vector.load %arg1[%c0, %c0_0, %c0_1, %c0_2] : memref<1x4x16x64xf32, #tpu.memory_space<vmem>>, vector<1x4x16x64xf32>
    %1 = vector.shape_cast %0 : vector<1x4x16x64xf32> to vector<4x16x64xf32>
    %c0_3 = arith.constant 0 : index
    %c0_4 = arith.constant 0 : index
    %c0_5 = arith.constant 0 : index
    %c0_6 = arith.constant 0 : index
    %2 = vector.load %arg2[%c0_3, %c0_4, %c0_5, %c0_6] : memref<1x4x1x64xf32, #tpu.memory_space<vmem>>, vector<1x4x1x64xf32>
    %3 = vector.shape_cast %2 : vector<1x4x1x64xf32> to vector<4x1x64xf32>
    %4 = arith.negf %3 : vector<4x1x64xf32>
    %5 = math.exp %4 : vector<4x1x64xf32>
    %cst = arith.constant 1.000000e+00 : f32
    %6 = vector.broadcast %cst : f32 to vector<4x1x64xf32>
    %7 = arith.addf %6, %5 : vector<4x1x64xf32>
    %8 = arith.divf %6, %7 : vector<4x1x64xf32>
    %9 = vector.broadcast %8 : vector<4x1x64xf32> to vector<4x16x64xf32>
    %10 = arith.mulf %1, %9 : vector<4x16x64xf32>
    %c0_7 = arith.constant 0 : index
    %c0_8 = arith.constant 0 : index
    %c0_9 = arith.constant 0 : index
    %c0_10 = arith.constant 0 : index
    %11 = vector.load %arg3[%c0_7, %c0_8, %c0_9, %c0_10] : memref<1x4x16x64xf32, #tpu.memory_space<vmem>>, vector<1x4x16x64xf32>
    %12 = vector.shape_cast %11 : vector<1x4x16x64xf32> to vector<4x16x64xf32>
    %13 = vector.shape_cast %10 : vector<4x16x64xf32> to vector<1x4x16x64xf32>
    tpu.vector_store %arg3[%c0_7, %c0_8, %c0_9, %c0_10], %13 {strides = array<i32>} : memref<1x4x16x64xf32, #tpu.memory_space<vmem>>, vector<1x4x16x64xf32>,
    %cst_11 = arith.constant dense<0.000000e+00> : vector<4x16xf32>
    %14 = vector.multi_reduction <add>, %10, %cst_11 [2] : vector<4x16x64xf32> to vector<4x16xf32>
    %15 = vector.shape_cast %14 : vector<4x16xf32> to vector<4x16x1xf32>
    %cst_12 = arith.constant 6.400000e+01 : f32
    %16 = vector.broadcast %cst_12 : f32 to vector<4x16x1xf32>
    %17 = arith.divf %15, %16 : vector<4x16x1xf32>
    %cst_13 = arith.constant dense<0.000000e+00> : vector<4x1xf32>
    %18 = vector.multi_reduction <add>, %17, %cst_13 [1] : vector<4x16x1xf32> to vector<4x1xf32>
    %19 = vector.shape_cast %18 : vector<4x1xf32> to vector<4x1x1xf32>
    %cst_14 = arith.constant 1.600000e+01 : f32
    %20 = vector.broadcast %cst_14 : f32 to vector<4x1x1xf32>
    %21 = arith.divf %19, %20 : vector<4x1x1xf32>
    %c0_15 = arith.constant 0 : index
    %c0_16 = arith.constant 0 : index
    %c0_17 = arith.constant 0 : index
    %c0_18 = arith.constant 0 : index
    %22 = vector.load %arg4[%c0_15, %c0_16, %c0_17, %c0_18] : memref<1x4x1x1xf32, #tpu.memory_space<vmem>>, vector<1x4x1x1xf32>
    %23 = vector.shape_cast %22 : vector<1x4x1x1xf32> to vector<4x1x1xf32>
    %24 = vector.shape_cast %21 : vector<4x1x1xf32> to vector<1x4x1x1xf32>
    tpu.vector_store %arg4[%c0_15, %c0_16, %c0_17, %c0_18], %24 {strides = array<i32>} : memref<1x4x1x1xf32, #tpu.memory_space<vmem>>, vector<1x4x1x1xf32>,
    %cst_19 = arith.constant dense<0xFF800000> : vector<4x16xf32>
    %25 = vector.multi_reduction <maximumf>, %10, %cst_19 [2] : vector<4x16x64xf32> to vector<4x16xf32>
    %26 = vector.shape_cast %25 : vector<4x16xf32> to vector<4x16x1xf32>
    %cst_20 = arith.constant dense<0xFF800000> : vector<4x1xf32>
    %27 = vector.multi_reduction <maximumf>, %26, %cst_20 [1] : vector<4x16x1xf32> to vector<4x1xf32>
    %28 = vector.shape_cast %27 : vector<4x1xf32> to vector<4x1x1xf32>
    %c0_21 = arith.constant 0 : index
    %c0_22 = arith.constant 0 : index
    %c0_23 = arith.constant 0 : index
    %c0_24 = arith.constant 0 : index
    %29 = vector.load %arg5[%c0_21, %c0_22, %c0_23, %c0_24] : memref<1x4x1x1xf32, #tpu.memory_space<vmem>>, vector<1x4x1x1xf32>
    %30 = vector.shape_cast %29 : vector<1x4x1x1xf32> to vector<4x1x1xf32>
    %31 = vector.shape_cast %28 : vector<4x1x1xf32> to vector<1x4x1x1xf32>
    tpu.vector_store %arg5[%c0_21, %c0_22, %c0_23, %c0_24], %31 {strides = array<i32>} : memref<1x4x1x1xf32, #tpu.memory_space<vmem>>, vector<1x4x1x1xf32>,
    return
  }
  func.func @transform_0(%arg0: i32) -> (i32, i32, i32, i32) {
    %c0_i32 = arith.constant 0 : i32
    %c0_i32_0 = arith.constant 0 : i32
    %c0_i32_1 = arith.constant 0 : i32
    %c0_i32_2 = arith.constant 0 : i32
    return %arg0, %c0_i32, %c0_i32_0, %c0_i32_1 : i32, i32, i32, i32
  }
  func.func @transform_1(%arg0: i32) -> (i32, i32, i32, i32) {
    %c0_i32 = arith.constant 0 : i32
    %c0_i32_0 = arith.constant 0 : i32
    %c0_i32_1 = arith.constant 0 : i32
    %c0_i32_2 = arith.constant 0 : i32
    return %arg0, %c0_i32, %c0_i32_0, %c0_i32_1 : i32, i32, i32, i32
  }
  func.func @transform_2(%arg0: i32) -> (i32, i32, i32, i32) {
    %c0_i32 = arith.constant 0 : i32
    %c0_i32_0 = arith.constant 0 : i32
    %c0_i32_1 = arith.constant 0 : i32
    %c0_i32_2 = arith.constant 0 : i32
    return %arg0, %c0_i32, %c0_i32_0, %c0_i32_1 : i32, i32, i32, i32
  }
  func.func @transform_3(%arg0: i32) -> (i32, i32, i32, i32) {
    %c0_i32 = arith.constant 0 : i32
    %c0_i32_0 = arith.constant 0 : i32
    %c0_i32_1 = arith.constant 0 : i32
    %c0_i32_2 = arith.constant 0 : i32
    return %arg0, %c0_i32, %c0_i32_0, %c0_i32_1 : i32, i32, i32, i32
  }
  func.func @transform_4(%arg0: i32) -> (i32, i32, i32, i32) {
    %c0_i32 = arith.constant 0 : i32
    %c0_i32_0 = arith.constant 0 : i32
    %c0_i32_1 = arith.constant 0 : i32
    %c0_i32_2 = arith.constant 0 : i32
    return %arg0, %c0_i32, %c0_i32_0, %c0_i32_1 : i32, i32, i32, i32
  }
}

</mosaic_0001>

<llo_original>
// kernel: tab_attention_forward.3
$region0: #{tab_attention_forward.3}
  #allocation0 [shape = 'u32[]', space=smem, size = 0x4, offset = 0x4, fixed_abs, tag = 'smem constant byte address 0x4 - core index']
  #allocation1 [shape = 'u32[144,128]{1,0:T(1,128)}', space=vmem, size = 0x12000, scoped, tag = 'internal scratch']
  %s0 = inlined_call_operand.vmem [shape: f32[2,4,16,64], index: 0, kind: input, shape index: {}]
  %s1 = inlined_call_operand.vmem [shape: f32[2,4,1,64], index: 1, kind: input, shape index: {}]
  %s2 = inlined_call_operand.vmem [shape: f32[2,4,16,64], index: 2, kind: output, shape index: {0}]
  %s3 = inlined_call_operand.vmem [shape: f32[2,4,1,1], index: 3, kind: output, shape index: {1}]
  %s4 = inlined_call_operand.vmem [shape: f32[2,4,1,1], index: 4, kind: output, shape index: {2}]
  %5 = xla_tuple %s2, %s3, %s4
  %s6 = sld [smem:[#allocation0]]
  $region57: #{tab_attention_forward.3} parent=0
    _
  %s8 = ssub.s32 1, %s6
  %s9 = scalar_select 0, %s8, %s6
  loop: start=0, step=1, limit=4
  $region2: #{tab_attention_forward.3} parent=0 // loop_pre_header
    _
  $region3: #{tab_attention_forward.3} parent=0 // loop_header
    %s11 = sphi 0, %s15
    %p12 = scmp.ge.s32.totalorder %s11, 4
    %s21 = sphi 0, %s23
    %s24 = sphi 0, %s21
    %s25 = sphi 0, %s24
    %s41 = sphi 0, %s25
    %s47 = sphi 0, %s49
    %s50 = sphi 0, %s47
    %s51 = sphi 0, %s50
    %s67 = sphi 0, %s51
    %s73 = sphi 0, %s75
    %s76 = sphi 0, %s73
    %s77 = sphi 0, %s76
    %s93 = sphi 0, %s77
    %s99 = sphi 0, %s101
    %s102 = sphi 0, %s99
    %s103 = sphi 0, %s102
    %s119 = sphi 0, %s103
    %s125 = sphi 0, %s127
    %s128 = sphi 0, %s125
    %s129 = sphi 0, %s128
    %s145 = sphi 0, %s129
  $region4: #{tab_attention_forward.3} parent=0 // loop_header_branch
    %14 = sbr.rel (%p12) target = $region8
  $region5: #{tab_attention_forward.3} parent=0 // loop_body
    %s16 = ssub.s32 %s11, 1
    %s17 = ssub.s32 %s11, 2
    %s18 = sadd.s32 %s11, 1
    %s19 = ssub.s32 %s11, %s18
    %p20 = scmp.eq.s32.totalorder %s19, 0
    %s22 = sadd.s32 %s21, 1
    %s23 = scalar_select %p20, %s21, %s22
    %p26 = pneg %p20
    %p27 = scmp.eq.s32.totalorder %s11, 1
    %p28 = por %p26, %p27
    %p29 = scmp.ne.s32.totalorder %s21, %s24
    %p30 = scmp.eq.s32.totalorder %s11, 0
    %p31 = por %p29, %p30
    %p32 = scmp.ne.s32.totalorder %s21, %s24
    %p33 = scmp.eq.s32.totalorder %s16, 1
    %p34 = por %p32, %p33
    %p35 = scmp.ne.s32.totalorder %s24, %s25
    %p36 = scmp.eq.s32.totalorder %s16, 0
    %p37 = por %p35, %p36
    %p38 = scmp.ne.s32.totalorder %s24, %s25
    %p39 = scmp.eq.s32.totalorder %s17, 1
    %p40 = por %p38, %p39
    %p42 = scmp.ne.s32.totalorder %s25, %s41
    %p43 = scmp.eq.s32.totalorder %s17, 0
    %p44 = por %p42, %p43
    %s45 = ssub.s32 %s11, %s18
    %p46 = scmp.eq.s32.totalorder %s45, 0
    %s48 = sadd.s32 %s47, 1
    %s49 = scalar_select %p46, %s47, %s48
    %p52 = pneg %p46
    %p53 = scmp.eq.s32.totalorder %s11, 1
    %p54 = por %p52, %p53
    %p55 = scmp.ne.s32.totalorder %s47, %s50
    %p56 = scmp.eq.s32.totalorder %s11, 0
    %p57 = por %p55, %p56
    %p58 = scmp.ne.s32.totalorder %s47, %s50
    %p59 = scmp.eq.s32.totalorder %s16, 1
    %p60 = por %p58, %p59
    %p61 = scmp.ne.s32.totalorder %s50, %s51
    %p62 = scmp.eq.s32.totalorder %s16, 0
    %p63 = por %p61, %p62
    %p64 = scmp.ne.s32.totalorder %s50, %s51
    %p65 = scmp.eq.s32.totalorder %s17, 1
    %p66 = por %p64, %p65
    %p68 = scmp.ne.s32.totalorder %s51, %s67
    %p69 = scmp.eq.s32.totalorder %s17, 0
    %p70 = por %p68, %p69
    %s71 = ssub.s32 %s11, %s18
    %p72 = scmp.eq.s32.totalorder %s71, 0
    %s74 = sadd.s32 %s73, 1
    %s75 = scalar_select %p72, %s73, %s74
    %p78 = pneg %p72
    %p79 = scmp.eq.s32.totalorder %s11, 1
    %p80 = por %p78, %p79
    %p81 = scmp.ne.s32.totalorder %s73, %s76
    %p82 = scmp.eq.s32.totalorder %s11, 0
    %p83 = por %p81, %p82
    %p84 = scmp.ne.s32.totalorder %s73, %s76
    %p85 = scmp.eq.s32.totalorder %s16, 1
    %p86 = por %p84, %p85
    %p87 = scmp.ne.s32.totalorder %s76, %s77
    %p88 = scmp.eq.s32.totalorder %s16, 0
    %p89 = por %p87, %p88
    %p90 = scmp.ne.s32.totalorder %s76, %s77
    %p91 = scmp.eq.s32.totalorder %s17, 1
    %p92 = por %p90, %p91
    %p94 = scmp.ne.s32.totalorder %s77, %s93
    %p95 = scmp.eq.s32.totalorder %s17, 0
    %p96 = por %p94, %p95
    %s97 = ssub.s32 %s11, %s18
    %p98 = scmp.eq.s32.totalorder %s97, 0
    %s100 = sadd.s32 %s99, 1
    %s101 = scalar_select %p98, %s99, %s100
    %p104 = pneg %p98
    %p105 = scmp.eq.s32.totalorder %s11, 1
    %p106 = por %p104, %p105
    %p107 = scmp.ne.s32.totalorder %s99, %s102
    %p108 = scmp.eq.s32.totalorder %s11, 0
    %p109 = por %p107, %p108
    %p110 = scmp.ne.s32.totalorder %s99, %s102
    %p111 = scmp.eq.s32.totalorder %s16, 1
    %p112 = por %p110, %p111
    %p113 = scmp.ne.s32.totalorder %s102, %s103
    %p114 = scmp.eq.s32.totalorder %s16, 0
    %p115 = por %p113, %p114
    %p116 = scmp.ne.s32.totalorder %s102, %s103
    %p117 = scmp.eq.s32.totalorder %s17, 1
    %p118 = por %p116, %p117
    %p120 = scmp.ne.s32.totalorder %s103, %s119
    %p121 = scmp.eq.s32.totalorder %s17, 0
    %p122 = por %p120, %p121
    %s123 = ssub.s32 %s11, %s18
    %p124 = scmp.eq.s32.totalorder %s123, 0
    %s126 = sadd.s32 %s125, 1
    %s127 = scalar_select %p124, %s125, %s126
    %p130 = pneg %p124
    %p131 = scmp.eq.s32.totalorder %s11, 1
    %p132 = por %p130, %p131
    %p133 = scmp.ne.s32.totalorder %s125, %s128
    %p134 = scmp.eq.s32.totalorder %s11, 0
    %p135 = por %p133, %p134
    %p136 = scmp.ne.s32.totalorder %s125, %s128
    %p137 = scmp.eq.s32.totalorder %s16, 1
    %p138 = por %p136, %p137
    %p139 = scmp.ne.s32.totalorder %s128, %s129
    %p140 = scmp.eq.s32.totalorder %s16, 0
    %p141 = por %p139, %p140
    %p142 = scmp.ne.s32.totalorder %s128, %s129
    %p143 = scmp.eq.s32.totalorder %s17, 1
    %p144 = por %p142, %p143
    %p146 = scmp.ne.s32.totalorder %s129, %s145
    %p147 = scmp.eq.s32.totalorder %s17, 0
    %p148 = por %p146, %p147
    %p149 = scmp.le.s32.totalorder 1, %s11
    %p150 = scmp.lt.s32.totalorder %s11, 3
    %p151 = pnand %p149, %p150
    %p152 = pneg %p151
    // Predicated region
    $region9: #{tab_attention_forward.3} parent=5 // pred_check
      _
    $region10: #{tab_attention_forward.3} parent=5 // pred_check_branch
      %154 = sbr.rel (%p151) target = $region12
    $region11: #{tab_attention_forward.3} parent=5 // pred_region
      %s155 = ssub.s32 %s11, 1
    $region12: #{tab_attention_forward.3} parent=5 // pred_fallthru
      _
    %p156 = scmp.lt.s32.totalorder %s11, 2
    // Predicated region
    $region13: #{tab_attention_forward.3} parent=5 // pred_check
      %p157 = pneg %p156
    $region14: #{tab_attention_forward.3} parent=5 // pred_check_branch
      %159 = sbr.rel (%p157) target = $region16
    $region15: #{tab_attention_forward.3} parent=5 // pred_region
      // Predicated region
      $region17: #{tab_attention_forward.3} parent=15 // pred_check
        %p160 = pneg %p31
      $region18: #{tab_attention_forward.3} parent=15 // pred_check_branch
        %162 = sbr.rel (%p160) target = $region20
      $region19: #{tab_attention_forward.3} parent=15 // pred_region
        %p163 = scmp.lt.s32.totalorder %s11, 1
        %s164 = scalar_select %p163, %s11, 1
        %s165 = smul.addr %s164, 8
        %s166 = smul.addr %s165, 8
        %s167 = scalar_lea.vmem %s0, %s166
      $region20: #{tab_attention_forward.3} parent=15 // pred_fallthru
        _
      // Predicated region
      $region21: #{tab_attention_forward.3} parent=15 // pred_check
        %p168 = pneg %p57
      $region22: #{tab_attention_forward.3} parent=15 // pred_check_branch
        %170 = sbr.rel (%p168) target = $region24
      $region23: #{tab_attention_forward.3} parent=15 // pred_region
        %p171 = scmp.lt.s32.totalorder %s11, 1
        %s172 = scalar_select %p171, %s11, 1
        %s173 = smul.addr %s172, 4
        %s174 = scalar_lea.vmem %s1, %s173
      $region24: #{tab_attention_forward.3} parent=15 // pred_fallthru
        _
    $region16: #{tab_attention_forward.3} parent=5 // pred_fallthru
      _
    %p175 = scmp.le.s32.totalorder 1, %s11
    %p176 = scmp.lt.s32.totalorder %s11, 3
    %p177 = pnand %p175, %p176
    %p178 = pneg %p177
    // Predicated region
    $region25: #{tab_attention_forward.3} parent=5 // pred_check
      _
    $region26: #{tab_attention_forward.3} parent=5 // pred_check_branch
      %180 = sbr.rel (%p177) target = $region28
    $region27: #{tab_attention_forward.3} parent=5 // pred_region
      %s181 = ssub.s32 %s11, 1
      %p182 = scmp.lt.s32.totalorder %s16, 1
      %s183 = scalar_select %p182, %s16, 1
      %s184 = smul.addr %s183, 8
      %s185 = smul.addr %s184, 8
      %s186 = scalar_lea.vmem %s0, %s185
      %p187 = pneg %p37
      %p188 = pneg %p34
      %p189 = scmp.lt.s32.totalorder %s16, 1
      %s190 = scalar_select %p189, %s16, 1
      %s191 = smul.addr %s190, 4
      %s192 = scalar_lea.vmem %s1, %s191
      %p193 = pneg %p63
      %p194 = pneg %p60
      %p195 = pneg %p89
      %p196 = pneg %p86
      %p197 = scmp.lt.s32.totalorder %s16, 1
      %s198 = scalar_select %p197, %s16, 1
      %s199 = smul.addr %s198, 8
      %s200 = smul.addr %s199, 8
      %s201 = scalar_lea.vmem %s2, %s200
      %p202 = pneg %p115
      %p203 = pneg %p112
      %p204 = scmp.lt.s32.totalorder %s16, 1
      %s205 = scalar_select %p204, %s16, 1
      %s206 = smul.addr %s205, 4
      %s207 = scalar_lea.vmem %s3, %s206
      %p208 = pneg %p141
      %p209 = pneg %p138
      %p210 = scmp.lt.s32.totalorder %s16, 1
      %s211 = scalar_select %p210, %s16, 1
      %s212 = smul.addr %s211, 4
      %s213 = scalar_lea.vmem %s4, %s212
      %p214 = scmp.lt.s32.totalorder %s16, 1
      %s215 = scalar_select %p214, %s16, 1
      %s216 = smul.addr %s215, 8
      %s217 = smul.addr %s216, 8
      %s218 = scalar_lea.vmem %s0, %s217
      %p219 = scmp.lt.s32.totalorder %s16, 1
      %s220 = scalar_select %p219, %s16, 1
      %s221 = smul.addr %s220, 4
      %s222 = scalar_lea.vmem %s1, %s221
      %p223 = scmp.lt.s32.totalorder %s16, 1
      %s224 = scalar_select %p223, %s16, 1
      %s225 = smul.addr %s224, 8
      %s226 = smul.addr %s225, 8
      %s227 = scalar_lea.vmem %s2, %s226
      %p228 = scmp.lt.s32.totalorder %s16, 1
      %s229 = scalar_select %p228, %s16, 1
      %s230 = smul.addr %s229, 4
      %s231 = scalar_lea.vmem %s3, %s230
      %p232 = scmp.lt.s32.totalorder %s16, 1
      %s233 = scalar_select %p232, %s16, 1
      %s234 = smul.addr %s233, 4
      %s235 = scalar_lea.vmem %s4, %s234
      %v236 = vld [vmem:[%s218] sm:$0xff]
      %v237 = vld [vmem:[%s218 + $0x8] sm:$0xff]
      %v238 = vld [vmem:[%s218 + $0x10] sm:$0xff]
      %v239 = vld [vmem:[%s218 + $0x18] sm:$0xff]
      %v240 = vld [vmem:[%s218 + $0x20] sm:$0xff]
      %v241 = vld [vmem:[%s218 + $0x28] sm:$0xff]
      %v242 = vld [vmem:[%s218 + $0x30] sm:$0xff]
      %v243 = vld [vmem:[%s218 + $0x38] sm:$0xff]
      %v244 = vld [vmem:[%s222] sm:$0x1]
      %v245 = vld [vmem:[%s222 + $0x1] sm:$0x1]
      %v246 = vld [vmem:[%s222 + $0x2] sm:$0x1]
      %v247 = vld [vmem:[%s222 + $0x3] sm:$0x1]
      %v248 = vxor.u32 %v244, 2147483648
      %v249 = vxor.u32 %v245, 2147483648
      %v250 = vxor.u32 %v246, 2147483648
      %v251 = vxor.u32 %v247, 2147483648
      %v252 = vmul.f32 %v248, 1.442695
      %v253 = vpow.pop %v252
      %v254 = vmul.f32 %v249, 1.442695
      %v255 = vpow.pop %v254
      %v256 = vmul.f32 %v250, 1.442695
      %v257 = vpow.pop %v256
      %v258 = vmul.f32 %v251, 1.442695
      %v259 = vpow.pop %v258
      %v260 = vadd.f32 %v253, 1.0
      %v261 = vadd.f32 %v255, 1.0
      %v262 = vadd.f32 %v257, 1.0
      %v263 = vadd.f32 %v259, 1.0
      %v264 = vrcp.pop %v260
      %v265 = vmul.f32 1.0, %v264
      %v266 = vrcp.pop %v261
      %v267 = vmul.f32 1.0, %v266
      %v268 = vrcp.pop %v262
      %v269 = vmul.f32 1.0, %v268
      %v270 = vrcp.pop %v263
      %v271 = vmul.f32 1.0, %v270
      %v276 = vlaneseq
      %v277 = vshrl.u32 %v276, 7
      %v278 = vsub.s32 0, %v277
      %v279 = vrot.slane %v265, %v278
      %v280 = vlaneseq
      %v281 = vshrl.u32 %v280, 7
      %v282 = vsub.s32 0, %v281
      %v283 = vrot.slane %v267, %v282
      %v284 = vlaneseq
      %v285 = vshrl.u32 %v284, 7
      %v286 = vsub.s32 0, %v285
      %v287 = vrot.slane %v269, %v286
      %v288 = vlaneseq
      %v289 = vshrl.u32 %v288, 7
      %v290 = vsub.s32 0, %v289
      %v291 = vrot.slane %v271, %v290
      %v296 = vmul.f32 %v236, %v279
      %v297 = vmul.f32 %v237, %v279
      %v298 = vmul.f32 %v238, %v283
      %v299 = vmul.f32 %v239, %v283
      %v300 = vmul.f32 %v240, %v287
      %v301 = vmul.f32 %v241, %v287
      %v302 = vmul.f32 %v242, %v291
      %v303 = vmul.f32 %v243, %v291
      %vm304 = vcmask 523264
      %305 = vst.msk [vmem:[%s227] sm:$0xff] %vm304, %v296
      %306 = vst.msk [vmem:[%s227 + $0x8] sm:$0xff] %vm304, %v297
      %307 = vst.msk [vmem:[%s227 + $0x10] sm:$0xff] %vm304, %v298
      %308 = vst.msk [vmem:[%s227 + $0x18] sm:$0xff] %vm304, %v299
      %309 = vst.msk [vmem:[%s227 + $0x20] sm:$0xff] %vm304, %v300
      %310 = vst.msk [vmem:[%s227 + $0x28] sm:$0xff] %vm304, %v301
      %311 = vst.msk [vmem:[%s227 + $0x30] sm:$0xff] %vm304, %v302
      %312 = vst.msk [vmem:[%s227 + $0x38] sm:$0xff] %vm304, %v303
      %v313 = vsel %vm304, %v296, 0.0
      %314 = vadd.xlane.f32.xlu0 %v313
      %v315 = vpop.xlane.xlu0 %314
      %v316 = vsel %vm304, %v297, 0.0
      %317 = vadd.xlane.f32.xlu0 %v316
      %v318 = vpop.xlane.xlu0 %317
      %v319 = vsel %vm304, %v298, 0.0
      %320 = vadd.xlane.f32.xlu0 %v319
      %v321 = vpop.xlane.xlu0 %320
      %v322 = vsel %vm304, %v299, 0.0
      %323 = vadd.xlane.f32.xlu0 %v322
      %v324 = vpop.xlane.xlu0 %323
      %v325 = vsel %vm304, %v300, 0.0
      %326 = vadd.xlane.f32.xlu0 %v325
      %v327 = vpop.xlane.xlu0 %326
      %v328 = vsel %vm304, %v301, 0.0
      %329 = vadd.xlane.f32.xlu0 %v328
      %v330 = vpop.xlane.xlu0 %329
      %v331 = vsel %vm304, %v302, 0.0
      %332 = vadd.xlane.f32.xlu0 %v331
      %v333 = vpop.xlane.xlu0 %332
      %v334 = vsel %vm304, %v303, 0.0
      %335 = vadd.xlane.f32.xlu0 %v334
      %v336 = vpop.xlane.xlu0 %335
      %v337 = vrcp.pop 64.0
      %v338 = vmul.f32 %v315, %v337
      %v339 = vmul.f32 %v318, %v337
      %v340 = vmul.f32 %v321, %v337
      %v341 = vmul.f32 %v324, %v337
      %v342 = vmul.f32 %v327, %v337
      %v343 = vmul.f32 %v330, %v337
      %v344 = vmul.f32 %v333, %v337
      %v345 = vmul.f32 %v336, %v337
      %v346 = vadd.f32 %v338, %v339
      %v347 = vrot.slane %v346, 4
      %v348 = vadd.f32 %v346, %v347
      %v349 = vrot.slane %v348, 2
      %v350 = vadd.f32 %v348, %v349
      %v351 = vrot.slane %v350, 1
      %v352 = vadd.f32 %v350, %v351
      %v353 = vadd.f32 %v340, %v341
      %v354 = vrot.slane %v353, 4
      %v355 = vadd.f32 %v353, %v354
      %v356 = vrot.slane %v355, 2
      %v357 = vadd.f32 %v355, %v356
      %v358 = vrot.slane %v357, 1
      %v359 = vadd.f32 %v357, %v358
      %v360 = vadd.f32 %v342, %v343
      %v361 = vrot.slane %v360, 4
      %v362 = vadd.f32 %v360, %v361
      %v363 = vrot.slane %v362, 2
      %v364 = vadd.f32 %v362, %v363
      %v365 = vrot.slane %v364, 1
      %v366 = vadd.f32 %v364, %v365
      %v367 = vadd.f32 %v344, %v345
      %v368 = vrot.slane %v367, 4
      %v369 = vadd.f32 %v367, %v368
      %v370 = vrot.slane %v369, 2
      %v371 = vadd.f32 %v369, %v370
      %v372 = vrot.slane %v371, 1
      %v373 = vadd.f32 %v371, %v372
      %v374 = vrcp.pop 16.0
      %v375 = vmul.f32 %v352, %v374
      %v376 = vmul.f32 %v359, %v374
      %v377 = vmul.f32 %v366, %v374
      %v378 = vmul.f32 %v373, %v374
      %vm379 = vcmask 0
      %380 = vst.msk [vmem:[%s231] sm:$0x1] %vm379, %v375
      %381 = vst.msk [vmem:[%s231 + $0x1] sm:$0x1] %vm379, %v376
      %382 = vst.msk [vmem:[%s231 + $0x2] sm:$0x1] %vm379, %v377
      %383 = vst.msk [vmem:[%s231 + $0x3] sm:$0x1] %vm379, %v378
      %v384 = vsel %vm304, %v296, -inf
      %385 = vmax.xlane.f32.xlu0 %v384
      %v386 = vpop.xlane.xlu0 %385
      %v387 = vsel %vm304, %v297, -inf
      %388 = vmax.xlane.f32.xlu0 %v387
      %v389 = vpop.xlane.xlu0 %388
      %v390 = vsel %vm304, %v298, -inf
      %391 = vmax.xlane.f32.xlu0 %v390
      %v392 = vpop.xlane.xlu0 %391
      %v393 = vsel %vm304, %v299, -inf
      %394 = vmax.xlane.f32.xlu0 %v393
      %v395 = vpop.xlane.xlu0 %394
      %v396 = vsel %vm304, %v300, -inf
      %397 = vmax.xlane.f32.xlu0 %v396
      %v398 = vpop.xlane.xlu0 %397
      %v399 = vsel %vm304, %v301, -inf
      %400 = vmax.xlane.f32.xlu0 %v399
      %v401 = vpop.xlane.xlu0 %400
      %v402 = vsel %vm304, %v302, -inf
      %403 = vmax.xlane.f32.xlu0 %v402
      %v404 = vpop.xlane.xlu0 %403
      %v405 = vsel %vm304, %v303, -inf
      %406 = vmax.xlane.f32.xlu0 %v405
      %v407 = vpop.xlane.xlu0 %406
      %v408 = vmax.f32 %v386, %v389
      %v409 = vrot.slane %v408, 4
      %v410 = vmax.f32 %v408, %v409
      %v411 = vrot.slane %v410, 2
      %v412 = vmax.f32 %v410, %v411
      %v413 = vrot.slane %v412, 1
      %v414 = vmax.f32 %v412, %v413
      %v415 = vmax.f32 %v392, %v395
      %v416 = vrot.slane %v415, 4
      %v417 = vmax.f32 %v415, %v416
      %v418 = vrot.slane %v417, 2
      %v419 = vmax.f32 %v417, %v418
      %v420 = vrot.slane %v419, 1
      %v421 = vmax.f32 %v419, %v420
      %v422 = vmax.f32 %v398, %v401
      %v423 = vrot.slane %v422, 4
      %v424 = vmax.f32 %v422, %v423
      %v425 = vrot.slane %v424, 2
      %v426 = vmax.f32 %v424, %v425
      %v427 = vrot.slane %v426, 1
      %v428 = vmax.f32 %v426, %v427
      %v429 = vmax.f32 %v404, %v407
      %v430 = vrot.slane %v429, 4
      %v431 = vmax.f32 %v429, %v430
      %v432 = vrot.slane %v431, 2
      %v433 = vmax.f32 %v431, %v432
      %v434 = vrot.slane %v433, 1
      %v435 = vmax.f32 %v433, %v434
      %436 = vst.msk [vmem:[%s235] sm:$0x1] %vm379, %v414
      %437 = vst.msk [vmem:[%s235 + $0x1] sm:$0x1] %vm379, %v421
      %438 = vst.msk [vmem:[%s235 + $0x2] sm:$0x1] %vm379, %v428
      %439 = vst.msk [vmem:[%s235 + $0x3] sm:$0x1] %vm379, %v435
      %p440 = scmp.lt.s32.totalorder %s16, 1
      %s441 = scalar_select %p440, %s16, 1
      %s442 = smul.addr %s441, 8
      %s443 = smul.addr %s442, 8
      %s444 = scalar_lea.vmem %s2, %s443
      %p445 = scmp.lt.s32.totalorder %s16, 1
      %s446 = scalar_select %p445, %s16, 1
      %s447 = smul.addr %s446, 4
      %s448 = scalar_lea.vmem %s3, %s447
      %p449 = scmp.lt.s32.totalorder %s16, 1
      %s450 = scalar_select %p449, %s16, 1
      %s451 = smul.addr %s450, 4
      %s452 = scalar_lea.vmem %s4, %s451
      // Predicated region
      $region29: #{tab_attention_forward.3} parent=27 // pred_check
        %p453 = pneg %p86
      $region30: #{tab_attention_forward.3} parent=27 // pred_check_branch
        %455 = sbr.rel (%p453) target = $region32
      $region31: #{tab_attention_forward.3} parent=27 // pred_region
        _
      $region32: #{tab_attention_forward.3} parent=27 // pred_fallthru
        _
      // Predicated region
      $region33: #{tab_attention_forward.3} parent=27 // pred_check
        %p456 = pneg %p112
      $region34: #{tab_attention_forward.3} parent=27 // pred_check_branch
        %458 = sbr.rel (%p456) target = $region36
      $region35: #{tab_attention_forward.3} parent=27 // pred_region
        _
      $region36: #{tab_attention_forward.3} parent=27 // pred_fallthru
        _
      // Predicated region
      $region37: #{tab_attention_forward.3} parent=27 // pred_check
        %p459 = pneg %p138
      $region38: #{tab_attention_forward.3} parent=27 // pred_check_branch
        %461 = sbr.rel (%p459) target = $region40
      $region39: #{tab_attention_forward.3} parent=27 // pred_region
        _
      $region40: #{tab_attention_forward.3} parent=27 // pred_fallthru
        _
    $region28: #{tab_attention_forward.3} parent=5 // pred_fallthru
      _
    %p462 = scmp.le.s32.totalorder 2, %s11
    // Predicated region
    $region41: #{tab_attention_forward.3} parent=5 // pred_check
      %p463 = pneg %p462
    $region42: #{tab_attention_forward.3} parent=5 // pred_check_branch
      %465 = sbr.rel (%p463) target = $region44
    $region43: #{tab_attention_forward.3} parent=5 // pred_region
      %s466 = ssub.s32 %s11, 2
      // Predicated region
      $region45: #{tab_attention_forward.3} parent=43 // pred_check
        %p467 = pneg %p92
      $region46: #{tab_attention_forward.3} parent=43 // pred_check_branch
        %469 = sbr.rel (%p467) target = $region48
      $region47: #{tab_attention_forward.3} parent=43 // pred_region
        %p470 = scmp.lt.s32.totalorder %s17, 1
        %s471 = scalar_select %p470, %s17, 1
        %s472 = smul.addr %s471, 8
        %s473 = smul.addr %s472, 8
        %s474 = scalar_lea.vmem %s2, %s473
      $region48: #{tab_attention_forward.3} parent=43 // pred_fallthru
        _
      // Predicated region
      $region49: #{tab_attention_forward.3} parent=43 // pred_check
        %p475 = pneg %p118
      $region50: #{tab_attention_forward.3} parent=43 // pred_check_branch
        %477 = sbr.rel (%p475) target = $region52
      $region51: #{tab_attention_forward.3} parent=43 // pred_region
        %p478 = scmp.lt.s32.totalorder %s17, 1
        %s479 = scalar_select %p478, %s17, 1
        %s480 = smul.addr %s479, 4
        %s481 = scalar_lea.vmem %s3, %s480
      $region52: #{tab_attention_forward.3} parent=43 // pred_fallthru
        _
      // Predicated region
      $region53: #{tab_attention_forward.3} parent=43 // pred_check
        %p482 = pneg %p144
      $region54: #{tab_attention_forward.3} parent=43 // pred_check_branch
        %484 = sbr.rel (%p482) target = $region56
      $region55: #{tab_attention_forward.3} parent=43 // pred_region
        %p485 = scmp.lt.s32.totalorder %s17, 1
        %s486 = scalar_select %p485, %s17, 1
        %s487 = smul.addr %s486, 4
        %s488 = scalar_lea.vmem %s4, %s487
      $region56: #{tab_attention_forward.3} parent=43 // pred_fallthru
        _
    $region44: #{tab_attention_forward.3} parent=5 // pred_fallthru
      _
  $region6: #{tab_attention_forward.3} parent=0 // loop_footer
    %s15 = sadd.s32 1, %s11
  $region7: #{tab_attention_forward.3} parent=0 // loop_footer_branch
    %10 = sbr.rel target = $region3
  $region8: #{tab_attention_forward.3} parent=0 // loop_exit
    _

// kernel: tab_attention_forward.2
$region0: #{tab_attention_forward.2}
  #allocation0 [shape = 'u32[]', space=smem, size = 0x4, offset = 0x4, fixed_abs, tag = 'smem constant byte address 0x4 - core index']
  #allocation1 [shape = 'u32[144,128]{1,0:T(1,128)}', space=vmem, size = 0x12000, scoped, tag = 'internal scratch']
  #allocation2 [shape = 'f32[1,1,1]{2,1,0:T(1,128)S(1)}', space=vmem, size = 0x200, scoped, tag = 'scoped memory for tab_attention_forward.2']
  %s0 = inlined_call_operand.vmem [shape: f32[2,4,16,64], index: 0, kind: input, shape index: {}]
  %s1 = inlined_call_operand.vmem [shape: f32[2,4,16,1], index: 1, kind: input, shape index: {}]
  %s2 = inlined_call_operand.vmem [shape: f32[2,4,64], index: 2, kind: input, shape index: {}]
  %s3 = inlined_call_operand.vmem [shape: f32[1,16,1], index: 3, kind: input, shape index: {}]
  %s4 = inlined_call_operand.<no memory space> [shape: f32[1,1,1], index: 4, kind: input, shape index: {}]
  %s5 = inlined_call_operand.vmem [shape: f32[1,16,1], index: 5, kind: input, shape index: {}]
  %s6 = inlined_call_operand.vmem [shape: f32[1,16,1], index: 6, kind: input, shape index: {}]
  %s7 = inlined_call_operand.vmem [shape: f32[3,64,64], index: 7, kind: input, shape index: {}]
  %s8 = inlined_call_operand.vmem [shape: f32[2,4,16,64], index: 8, kind: output, shape index: {0}]
  %s9 = inlined_call_operand.vmem [shape: f32[2,4,64], index: 9, kind: output, shape index: {1}]
  %10 = xla_tuple %s8, %s9
  %s11 = sld [smem:[#allocation0]]
  $region73: #{tab_attention_forward.2} parent=0
    _
  %s13 = ssub.s32 1, %s11
  %s14 = scalar_select 0, %s13, %s11
  %v15 = vstv %s4
  %16 = vst [vmem:[#allocation2] sm:$0x1] %v15
  loop: start=0, step=1, limit=4
  $region2: #{tab_attention_forward.2} parent=0 // loop_pre_header
    _
  $region3: #{tab_attention_forward.2} parent=0 // loop_header
    %s18 = sphi 0, %s22
    %p19 = scmp.ge.s32.totalorder %s18, 4
    %s28 = sphi 0, %s30
    %s31 = sphi 0, %s28
    %s32 = sphi 0, %s31
    %s48 = sphi 0, %s32
    %s54 = sphi 0, %s56
    %s57 = sphi 0, %s54
    %s58 = sphi 0, %s57
    %s74 = sphi 0, %s58
    %s80 = sphi 0, %s82
    %s83 = sphi 0, %s80
    %s84 = sphi 0, %s83
    %s100 = sphi 0, %s84
    %s104 = sphi 0, %s104
    %s106 = sphi 0, %s104
    %s107 = sphi 0, %s106
    %s121 = sphi 0, %s107
    %s125 = sphi 0, %s125
    %s127 = sphi 0, %s125
    %s128 = sphi 0, %s127
    %s142 = sphi 0, %s128
    %s146 = sphi 0, %s146
    %s148 = sphi 0, %s146
    %s149 = sphi 0, %s148
    %s163 = sphi 0, %s149
    %s167 = sphi 0, %s167
    %s169 = sphi 0, %s167
    %s170 = sphi 0, %s169
    %s184 = sphi 0, %s170
    %s188 = sphi 0, %s188
    %s190 = sphi 0, %s188
    %s191 = sphi 0, %s190
    %s205 = sphi 0, %s191
    %s211 = sphi 0, %s213
    %s214 = sphi 0, %s211
    %s215 = sphi 0, %s214
    %s231 = sphi 0, %s215
    %s237 = sphi 0, %s239
    %s240 = sphi 0, %s237
    %s241 = sphi 0, %s240
    %s257 = sphi 0, %s241
  $region4: #{tab_attention_forward.2} parent=0 // loop_header_branch
    %21 = sbr.rel (%p19) target = $region8
  $region5: #{tab_attention_forward.2} parent=0 // loop_body
    %s23 = ssub.s32 %s18, 1
    %s24 = ssub.s32 %s18, 2
    %s25 = sadd.s32 %s18, 1
    %s26 = ssub.s32 %s18, %s25
    %p27 = scmp.eq.s32.totalorder %s26, 0
    %s29 = sadd.s32 %s28, 1
    %s30 = scalar_select %p27, %s28, %s29
    %p33 = pneg %p27
    %p34 = scmp.eq.s32.totalorder %s18, 1
    %p35 = por %p33, %p34
    %p36 = scmp.ne.s32.totalorder %s28, %s31
    %p37 = scmp.eq.s32.totalorder %s18, 0
    %p38 = por %p36, %p37
    %p39 = scmp.ne.s32.totalorder %s28, %s31
    %p40 = scmp.eq.s32.totalorder %s23, 1
    %p41 = por %p39, %p40
    %p42 = scmp.ne.s32.totalorder %s31, %s32
    %p43 = scmp.eq.s32.totalorder %s23, 0
    %p44 = por %p42, %p43
    %p45 = scmp.ne.s32.totalorder %s31, %s32
    %p46 = scmp.eq.s32.totalorder %s24, 1
    %p47 = por %p45, %p46
    %p49 = scmp.ne.s32.totalorder %s32, %s48
    %p50 = scmp.eq.s32.totalorder %s24, 0
    %p51 = por %p49, %p50
    %s52 = ssub.s32 %s18, %s25
    %p53 = scmp.eq.s32.totalorder %s52, 0
    %s55 = sadd.s32 %s54, 1
    %s56 = scalar_select %p53, %s54, %s55
    %p59 = pneg %p53
    %p60 = scmp.eq.s32.totalorder %s18, 1
    %p61 = por %p59, %p60
    %p62 = scmp.ne.s32.totalorder %s54, %s57
    %p63 = scmp.eq.s32.totalorder %s18, 0
    %p64 = por %p62, %p63
    %p65 = scmp.ne.s32.totalorder %s54, %s57
    %p66 = scmp.eq.s32.totalorder %s23, 1
    %p67 = por %p65, %p66
    %p68 = scmp.ne.s32.totalorder %s57, %s58
    %p69 = scmp.eq.s32.totalorder %s23, 0
    %p70 = por %p68, %p69
    %p71 = scmp.ne.s32.totalorder %s57, %s58
    %p72 = scmp.eq.s32.totalorder %s24, 1
    %p73 = por %p71, %p72
    %p75 = scmp.ne.s32.totalorder %s58, %s74
    %p76 = scmp.eq.s32.totalorder %s24, 0
    %p77 = por %p75, %p76
    %s78 = ssub.s32 %s18, %s25
    %p79 = scmp.eq.s32.totalorder %s78, 0
    %s81 = sadd.s32 %s80, 1
    %s82 = scalar_select %p79, %s80, %s81
    %p85 = pneg %p79
    %p86 = scmp.eq.s32.totalorder %s18, 1
    %p87 = por %p85, %p86
    %p88 = scmp.ne.s32.totalorder %s80, %s83
    %p89 = scmp.eq.s32.totalorder %s18, 0
    %p90 = por %p88, %p89
    %p91 = scmp.ne.s32.totalorder %s80, %s83
    %p92 = scmp.eq.s32.totalorder %s23, 1
    %p93 = por %p91, %p92
    %p94 = scmp.ne.s32.totalorder %s83, %s84
    %p95 = scmp.eq.s32.totalorder %s23, 0
    %p96 = por %p94, %p95
    %p97 = scmp.ne.s32.totalorder %s83, %s84
    %p98 = scmp.eq.s32.totalorder %s24, 1
    %p99 = por %p97, %p98
    %p101 = scmp.ne.s32.totalorder %s84, %s100
    %p102 = scmp.eq.s32.totalorder %s24, 0
    %p103 = por %p101, %p102
    %s105 = sadd.s32 %s104, 1
    %p108 = scmp.eq.s32.totalorder %s18, 1
    %p109 = scmp.ne.s32.totalorder %s104, %s106
    %p110 = scmp.eq.s32.totalorder %s18, 0
    %p111 = por %p109, %p110
    %p112 = scmp.ne.s32.totalorder %s104, %s106
    %p113 = scmp.eq.s32.totalorder %s23, 1
    %p114 = por %p112, %p113
    %p115 = scmp.ne.s32.totalorder %s106, %s107
    %p116 = scmp.eq.s32.totalorder %s23, 0
    %p117 = por %p115, %p116
    %p118 = scmp.ne.s32.totalorder %s106, %s107
    %p119 = scmp.eq.s32.totalorder %s24, 1
    %p120 = por %p118, %p119
    %p122 = scmp.ne.s32.totalorder %s107, %s121
    %p123 = scmp.eq.s32.totalorder %s24, 0
    %p124 = por %p122, %p123
    %s126 = sadd.s32 %s125, 1
    %p129 = scmp.eq.s32.totalorder %s18, 1
    %p130 = scmp.ne.s32.totalorder %s125, %s127
    %p131 = scmp.eq.s32.totalorder %s18, 0
    %p132 = por %p130, %p131
    %p133 = scmp.ne.s32.totalorder %s125, %s127
    %p134 = scmp.eq.s32.totalorder %s23, 1
    %p135 = por %p133, %p134
    %p136 = scmp.ne.s32.totalorder %s127, %s128
    %p137 = scmp.eq.s32.totalorder %s23, 0
    %p138 = por %p136, %p137
    %p139 = scmp.ne.s32.totalorder %s127, %s128
    %p140 = scmp.eq.s32.totalorder %s24, 1
    %p141 = por %p139, %p140
    %p143 = scmp.ne.s32.totalorder %s128, %s142
    %p144 = scmp.eq.s32.totalorder %s24, 0
    %p145 = por %p143, %p144
    %s147 = sadd.s32 %s146, 1
    %p150 = scmp.eq.s32.totalorder %s18, 1
    %p151 = scmp.ne.s32.totalorder %s146, %s148
    %p152 = scmp.eq.s32.totalorder %s18, 0
    %p153 = por %p151, %p152
    %p154 = scmp.ne.s32.totalorder %s146, %s148
    %p155 = scmp.eq.s32.totalorder %s23, 1
    %p156 = por %p154, %p155
    %p157 = scmp.ne.s32.totalorder %s148, %s149
    %p158 = scmp.eq.s32.totalorder %s23, 0
    %p159 = por %p157, %p158
    %p160 = scmp.ne.s32.totalorder %s148, %s149
    %p161 = scmp.eq.s32.totalorder %s24, 1
    %p162 = por %p160, %p161
    %p164 = scmp.ne.s32.totalorder %s149, %s163
    %p165 = scmp.eq.s32.totalorder %s24, 0
    %p166 = por %p164, %p165
    %s168 = sadd.s32 %s167, 1
    %p171 = scmp.eq.s32.totalorder %s18, 1
    %p172 = scmp.ne.s32.totalorder %s167, %s169
    %p173 = scmp.eq.s32.totalorder %s18, 0
    %p174 = por %p172, %p173
    %p175 = scmp.ne.s32.totalorder %s167, %s169
    %p176 = scmp.eq.s32.totalorder %s23, 1
    %p177 = por %p175, %p176
    %p178 = scmp.ne.s32.totalorder %s169, %s170
    %p179 = scmp.eq.s32.totalorder %s23, 0
    %p180 = por %p178, %p179
    %p181 = scmp.ne.s32.totalorder %s169, %s170
    %p182 = scmp.eq.s32.totalorder %s24, 1
    %p183 = por %p181, %p182
    %p185 = scmp.ne.s32.totalorder %s170, %s184
    %p186 = scmp.eq.s32.totalorder %s24, 0
    %p187 = por %p185, %p186
    %s189 = sadd.s32 %s188, 1
    %p192 = scmp.eq.s32.totalorder %s18, 1
    %p193 = scmp.ne.s32.totalorder %s188, %s190
    %p194 = scmp.eq.s32.totalorder %s18, 0
    %p195 = por %p193, %p194
    %p196 = scmp.ne.s32.totalorder %s188, %s190
    %p197 = scmp.eq.s32.totalorder %s23, 1
    %p198 = por %p196, %p197
    %p199 = scmp.ne.s32.totalorder %s190, %s191
    %p200 = scmp.eq.s32.totalorder %s23, 0
    %p201 = por %p199, %p200
    %p202 = scmp.ne.s32.totalorder %s190, %s191
    %p203 = scmp.eq.s32.totalorder %s24, 1
    %p204 = por %p202, %p203
    %p206 = scmp.ne.s32.totalorder %s191, %s205
    %p207 = scmp.eq.s32.totalorder %s24, 0
    %p208 = por %p206, %p207
    %s209 = ssub.s32 %s18, %s25
    %p210 = scmp.eq.s32.totalorder %s209, 0
    %s212 = sadd.s32 %s211, 1
    %s213 = scalar_select %p210, %s211, %s212
    %p216 = pneg %p210
    %p217 = scmp.eq.s32.totalorder %s18, 1
    %p218 = por %p216, %p217
    %p219 = scmp.ne.s32.totalorder %s211, %s214
    %p220 = scmp.eq.s32.totalorder %s18, 0
    %p221 = por %p219, %p220
    %p222 = scmp.ne.s32.totalorder %s211, %s214
    %p223 = scmp.eq.s32.totalorder %s23, 1
    %p224 = por %p222, %p223
    %p225 = scmp.ne.s32.totalorder %s214, %s215
    %p226 = scmp.eq.s32.totalorder %s23, 0
    %p227 = por %p225, %p226
    %p228 = scmp.ne.s32.totalorder %s214, %s215
    %p229 = scmp.eq.s32.totalorder %s24, 1
    %p230 = por %p228, %p229
    %p232 = scmp.ne.s32.totalorder %s215, %s231
    %p233 = scmp.eq.s32.totalorder %s24, 0
    %p234 = por %p232, %p233
    %s235 = ssub.s32 %s18, %s25
    %p236 = scmp.eq.s32.totalorder %s235, 0
    %s238 = sadd.s32 %s237, 1
    %s239 = scalar_select %p236, %s237, %s238
    %p242 = pneg %p236
    %p243 = scmp.eq.s32.totalorder %s18, 1
    %p244 = por %p242, %p243
    %p245 = scmp.ne.s32.totalorder %s237, %s240
    %p246 = scmp.eq.s32.totalorder %s18, 0
    %p247 = por %p245, %p246
    %p248 = scmp.ne.s32.totalorder %s237, %s240
    %p249 = scmp.eq.s32.totalorder %s23, 1
    %p250 = por %p248, %p249
    %p251 = scmp.ne.s32.totalorder %s240, %s241
    %p252 = scmp.eq.s32.totalorder %s23, 0
    %p253 = por %p251, %p252
    %p254 = scmp.ne.s32.totalorder %s240, %s241
    %p255 = scmp.eq.s32.totalorder %s24, 1
    %p256 = por %p254, %p255
    %p258 = scmp.ne.s32.totalorder %s241, %s257
    %p259 = scmp.eq.s32.totalorder %s24, 0
    %p260 = por %p258, %p259
    %p261 = scmp.le.s32.totalorder 1, %s18
    %p262 = scmp.lt.s32.totalorder %s18, 3
    %p263 = pnand %p261, %p262
    %p264 = pneg %p263
    // Predicated region
    $region9: #{tab_attention_forward.2} parent=5 // pred_check
      _
    $region10: #{tab_attention_forward.2} parent=5 // pred_check_branch
      %266 = sbr.rel (%p263) target = $region12
    $region11: #{tab_attention_forward.2} parent=5 // pred_region
      %s267 = ssub.s32 %s18, 1
      // Predicated region
      $region13: #{tab_attention_forward.2} parent=11 // pred_check
        %p268 = pneg %p117
      $region14: #{tab_attention_forward.2} parent=11 // pred_check_branch
        %270 = sbr.rel (%p268) target = $region16
      $region15: #{tab_attention_forward.2} parent=11 // pred_region
        _
      $region16: #{tab_attention_forward.2} parent=11 // pred_fallthru
        _
      // Predicated region
      $region17: #{tab_attention_forward.2} parent=11 // pred_check
        %p271 = pneg %p138
      $region18: #{tab_attention_forward.2} parent=11 // pred_check_branch
        %273 = sbr.rel (%p271) target = $region20
      $region19: #{tab_attention_forward.2} parent=11 // pred_region
        _
      $region20: #{tab_attention_forward.2} parent=11 // pred_fallthru
        _
      // Predicated region
      $region21: #{tab_attention_forward.2} parent=11 // pred_check
        %p274 = pneg %p159
      $region22: #{tab_attention_forward.2} parent=11 // pred_check_branch
        %276 = sbr.rel (%p274) target = $region24
      $region23: #{tab_attention_forward.2} parent=11 // pred_region
        _
      $region24: #{tab_attention_forward.2} parent=11 // pred_fallthru
        _
      // Predicated region
      $region25: #{tab_attention_forward.2} parent=11 // pred_check
        %p277 = pneg %p180
      $region26: #{tab_attention_forward.2} parent=11 // pred_check_branch
        %279 = sbr.rel (%p277) target = $region28
      $region27: #{tab_attention_forward.2} parent=11 // pred_region
        _
      $region28: #{tab_attention_forward.2} parent=11 // pred_fallthru
        _
      // Predicated region
      $region29: #{tab_attention_forward.2} parent=11 // pred_check
        %p280 = pneg %p201
      $region30: #{tab_attention_forward.2} parent=11 // pred_check_branch
        %282 = sbr.rel (%p280) target = $region32
      $region31: #{tab_attention_forward.2} parent=11 // pred_region
        _
      $region32: #{tab_attention_forward.2} parent=11 // pred_fallthru
        _
    $region12: #{tab_attention_forward.2} parent=5 // pred_fallthru
      _
    %p283 = scmp.lt.s32.totalorder %s18, 2
    // Predicated region
    $region33: #{tab_attention_forward.2} parent=5 // pred_check
      %p284 = pneg %p283
    $region34: #{tab_attention_forward.2} parent=5 // pred_check_branch
      %286 = sbr.rel (%p284) target = $region36
    $region35: #{tab_attention_forward.2} parent=5 // pred_region
      // Predicated region
      $region37: #{tab_attention_forward.2} parent=35 // pred_check
        %p287 = pneg %p38
      $region38: #{tab_attention_forward.2} parent=35 // pred_check_branch
        %289 = sbr.rel (%p287) target = $region40
      $region39: #{tab_attention_forward.2} parent=35 // pred_region
        %p290 = scmp.lt.s32.totalorder %s18, 1
        %s291 = scalar_select %p290, %s18, 1
        %s292 = smul.addr %s291, 8
        %s293 = smul.addr %s292, 8
        %s294 = scalar_lea.vmem %s0, %s293
      $region40: #{tab_attention_forward.2} parent=35 // pred_fallthru
        _
      // Predicated region
      $region41: #{tab_attention_forward.2} parent=35 // pred_check
        %p295 = pneg %p64
      $region42: #{tab_attention_forward.2} parent=35 // pred_check_branch
        %297 = sbr.rel (%p295) target = $region44
      $region43: #{tab_attention_forward.2} parent=35 // pred_region
        %p298 = scmp.lt.s32.totalorder %s18, 1
        %s299 = scalar_select %p298, %s18, 1
        %s300 = smul.addr %s299, 8
        %s301 = smul.addr %s300, 8
        %s302 = scalar_lea.vmem %s1, %s301
      $region44: #{tab_attention_forward.2} parent=35 // pred_fallthru
        _
      // Predicated region
      $region45: #{tab_attention_forward.2} parent=35 // pred_check
        %p303 = pneg %p90
      $region46: #{tab_attention_forward.2} parent=35 // pred_check_branch
        %305 = sbr.rel (%p303) target = $region48
      $region47: #{tab_attention_forward.2} parent=35 // pred_region
        %p306 = scmp.lt.s32.totalorder %s18, 1
        %s307 = scalar_select %p306, %s18, 1
        %s308 = smul.addr %s307, 4
        %s309 = scalar_lea.vmem %s2, %s308
      $region48: #{tab_attention_forward.2} parent=35 // pred_fallthru
        _
    $region36: #{tab_attention_forward.2} parent=5 // pred_fallthru
      _
    %p310 = scmp.le.s32.totalorder 1, %s18
    %p311 = scmp.lt.s32.totalorder %s18, 3
    %p312 = pnand %p310, %p311
    %p313 = pneg %p312
    // Predicated region
    $region49: #{tab_attention_forward.2} parent=5 // pred_check
      _
    $region50: #{tab_attention_forward.2} parent=5 // pred_check_branch
      %315 = sbr.rel (%p312) target = $region52
    $region51: #{tab_attention_forward.2} parent=5 // pred_region
      %s316 = ssub.s32 %s18, 1
      %p317 = scmp.lt.s32.totalorder %s23, 1
      %s318 = scalar_select %p317, %s23, 1
      %s319 = smul.addr %s318, 8
      %s320 = smul.addr %s319, 8
      %s321 = scalar_lea.vmem %s0, %s320
      %p322 = pneg %p44
      %p323 = pneg %p41
      %p324 = scmp.lt.s32.totalorder %s23, 1
      %s325 = scalar_select %p324, %s23, 1
      %s326 = smul.addr %s325, 8
      %s327 = smul.addr %s326, 8
      %s328 = scalar_lea.vmem %s1, %s327
      %p329 = pneg %p70
      %p330 = pneg %p67
      %p331 = scmp.lt.s32.totalorder %s23, 1
      %s332 = scalar_select %p331, %s23, 1
      %s333 = smul.addr %s332, 4
      %s334 = scalar_lea.vmem %s2, %s333
      %p335 = pneg %p96
      %p336 = pneg %p93
      %p337 = pneg %p117
      %p338 = pneg %p114
      %p339 = pneg %p138
      %p340 = pneg %p135
      %p341 = pneg %p159
      %p342 = pneg %p156
      %p343 = pneg %p180
      %p344 = pneg %p177
      %p345 = pneg %p201
      %p346 = pneg %p198
      %p347 = pneg %p227
      %p348 = pneg %p224
      %p349 = scmp.lt.s32.totalorder %s23, 1
      %s350 = scalar_select %p349, %s23, 1
      %s351 = smul.addr %s350, 8
      %s352 = smul.addr %s351, 8
      %s353 = scalar_lea.vmem %s8, %s352
      %p354 = pneg %p253
      %p355 = pneg %p250
      %p356 = scmp.lt.s32.totalorder %s23, 1
      %s357 = scalar_select %p356, %s23, 1
      %s358 = smul.addr %s357, 4
      %s359 = scalar_lea.vmem %s9, %s358
      %p360 = scmp.lt.s32.totalorder %s23, 1
      %s361 = scalar_select %p360, %s23, 1
      %s362 = smul.addr %s361, 8
      %s363 = smul.addr %s362, 8
      %s364 = scalar_lea.vmem %s0, %s363
      %p365 = scmp.lt.s32.totalorder %s23, 1
      %s366 = scalar_select %p365, %s23, 1
      %s367 = smul.addr %s366, 8
      %s368 = smul.addr %s367, 8
      %s369 = scalar_lea.vmem %s1, %s368
      %p370 = scmp.lt.s32.totalorder %s23, 1
      %s371 = scalar_select %p370, %s23, 1
      %s372 = smul.addr %s371, 4
      %s373 = scalar_lea.vmem %s2, %s372
      %p374 = scmp.lt.s32.totalorder %s23, 1
      %s375 = scalar_select %p374, %s23, 1
      %s376 = smul.addr %s375, 8
      %s377 = smul.addr %s376, 8
      %s378 = scalar_lea.vmem %s8, %s377
      %p379 = scmp.lt.s32.totalorder %s23, 1
      %s380 = scalar_select %p379, %s23, 1
      %s381 = smul.addr %s380, 4
      %s382 = scalar_lea.vmem %s9, %s381
      %v383 = vld [vmem:[%s364] sm:$0xff]
      %v384 = vld [vmem:[%s364 + $0x8] sm:$0xff]
      %v385 = vld [vmem:[%s364 + $0x10] sm:$0xff]
      %v386 = vld [vmem:[%s364 + $0x18] sm:$0xff]
      %v387 = vld [vmem:[%s364 + $0x20] sm:$0xff]
      %v388 = vld [vmem:[%s364 + $0x28] sm:$0xff]
      %v389 = vld [vmem:[%s364 + $0x30] sm:$0xff]
      %v390 = vld [vmem:[%s364 + $0x38] sm:$0xff]
      %v391 = vld [vmem:[%s3] sm:$0xff]
      %v392 = vld [vmem:[%s3 + $0x8] sm:$0xff]
      %v393 = vld [vmem:[#allocation2] sm:$0x1]
      %vm394 = vcmask 523264
      %v395 = vsel %vm394, %v383, 0.0
      %396 = vadd.xlane.f32.xlu0 %v395
      %v397 = vpop.xlane.xlu0 %396
      %v398 = vsel %vm394, %v384, 0.0
      %399 = vadd.xlane.f32.xlu0 %v398
      %v400 = vpop.xlane.xlu0 %399
      %v401 = vsel %vm394, %v385, 0.0
      %402 = vadd.xlane.f32.xlu0 %v401
      %v403 = vpop.xlane.xlu0 %402
      %v404 = vsel %vm394, %v386, 0.0
      %405 = vadd.xlane.f32.xlu0 %v404
      %v406 = vpop.xlane.xlu0 %405
      %v407 = vsel %vm394, %v387, 0.0
      %408 = vadd.xlane.f32.xlu0 %v407
      %v409 = vpop.xlane.xlu0 %408
      %v410 = vsel %vm394, %v388, 0.0
      %411 = vadd.xlane.f32.xlu0 %v410
      %v412 = vpop.xlane.xlu0 %411
      %v413 = vsel %vm394, %v389, 0.0
      %414 = vadd.xlane.f32.xlu0 %v413
      %v415 = vpop.xlane.xlu0 %414
      %v416 = vsel %vm394, %v390, 0.0
      %417 = vadd.xlane.f32.xlu0 %v416
      %v418 = vpop.xlane.xlu0 %417
      %v419 = vrcp.pop 64.0
      %v420 = vmul.f32 %v397, %v419
      %v421 = vmul.f32 %v400, %v419
      %v422 = vmul.f32 %v403, %v419
      %v423 = vmul.f32 %v406, %v419
      %v424 = vmul.f32 %v409, %v419
      %v425 = vmul.f32 %v412, %v419
      %v426 = vmul.f32 %v415, %v419
      %v427 = vmul.f32 %v418, %v419
      %v428 = vsel %vm394, %v383, -inf
      %429 = vmax.xlane.f32.xlu0 %v428
      %v430 = vpop.xlane.xlu0 %429
      %v431 = vsel %vm394, %v384, -inf
      %432 = vmax.xlane.f32.xlu0 %v431
      %v433 = vpop.xlane.xlu0 %432
      %v434 = vsel %vm394, %v385, -inf
      %435 = vmax.xlane.f32.xlu0 %v434
      %v436 = vpop.xlane.xlu0 %435
      %v437 = vsel %vm394, %v386, -inf
      %438 = vmax.xlane.f32.xlu0 %v437
      %v439 = vpop.xlane.xlu0 %438
      %v440 = vsel %vm394, %v387, -inf
      %441 = vmax.xlane.f32.xlu0 %v440
      %v442 = vpop.xlane.xlu0 %441
      %v443 = vsel %vm394, %v388, -inf
      %444 = vmax.xlane.f32.xlu0 %v443
      %v445 = vpop.xlane.xlu0 %444
      %v446 = vsel %vm394, %v389, -inf
      %447 = vmax.xlane.f32.xlu0 %v446
      %v448 = vpop.xlane.xlu0 %447
      %v449 = vsel %vm394, %v390, -inf
      %450 = vmax.xlane.f32.xlu0 %v449
      %v451 = vpop.xlane.xlu0 %450
      %v452 = vld [vmem:[%s369] sm:$0xff]
      %v453 = vld [vmem:[%s369 + $0x8] sm:$0xff]
      %v454 = vld [vmem:[%s369 + $0x10] sm:$0xff]
      %v455 = vld [vmem:[%s369 + $0x18] sm:$0xff]
      %v456 = vld [vmem:[%s369 + $0x20] sm:$0xff]
      %v457 = vld [vmem:[%s369 + $0x28] sm:$0xff]
      %v458 = vld [vmem:[%s369 + $0x30] sm:$0xff]
      %v459 = vld [vmem:[%s369 + $0x38] sm:$0xff]
      %v460 = vmul.f32 %v420, %v391
      %v461 = vmul.f32 %v421, %v392
      %v462 = vmul.f32 %v422, %v391
      %v463 = vmul.f32 %v423, %v392
      %v464 = vmul.f32 %v424, %v391
      %v465 = vmul.f32 %v425, %v392
      %v466 = vmul.f32 %v426, %v391
      %v467 = vmul.f32 %v427, %v392
      %vm468 = vcmask 7168
      %v469 = vsel %vm468, %v460, 0.0
      %v470 = vsel %vm468, %v461, 0.0
      %v471 = vadd.f32 %v469, %v470
      %v472 = vrot.slane %v471, 4
      %v473 = vadd.f32 %v471, %v472
      %v474 = vrot.slane %v473, 2
      %v475 = vadd.f32 %v473, %v474
      %v476 = vrot.slane %v475, 1
      %v477 = vadd.f32 %v475, %v476
      %v478 = vsel %vm468, %v462, 0.0
      %v479 = vsel %vm468, %v463, 0.0
      %v480 = vadd.f32 %v478, %v479
      %v481 = vrot.slane %v480, 4
      %v482 = vadd.f32 %v480, %v481
      %v483 = vrot.slane %v482, 2
      %v484 = vadd.f32 %v482, %v483
      %v485 = vrot.slane %v484, 1
      %v486 = vadd.f32 %v484, %v485
      %v487 = vsel %vm468, %v464, 0.0
      %v488 = vsel %vm468, %v465, 0.0
      %v489 = vadd.f32 %v487, %v488
      %v490 = vrot.slane %v489, 4
      %v491 = vadd.f32 %v489, %v490
      %v492 = vrot.slane %v491, 2
      %v493 = vadd.f32 %v491, %v492
      %v494 = vrot.slane %v493, 1
      %v495 = vadd.f32 %v493, %v494
      %v496 = vsel %vm468, %v466, 0.0
      %v497 = vsel %vm468, %v467, 0.0
      %v498 = vadd.f32 %v496, %v497
      %v499 = vrot.slane %v498, 4
      %v500 = vadd.f32 %v498, %v499
      %v501 = vrot.slane %v500, 2
      %v502 = vadd.f32 %v500, %v501
      %v503 = vrot.slane %v502, 1
      %v504 = vadd.f32 %v502, %v503
      %v505 = vadd.f32 %v477, %v393
      %v506 = vadd.f32 %v486, %v393
      %v507 = vadd.f32 %v495, %v393
      %v508 = vadd.f32 %v504, %v393
      %v509 = vmax.f32 %v505, 0.0
      %v510 = vmax.f32 %v506, 0.0
      %v511 = vmax.f32 %v507, 0.0
      %v512 = vmax.f32 %v508, 0.0
      %v513 = vmul.f32 %v430, %v391
      %v514 = vmul.f32 %v433, %v392
      %v515 = vmul.f32 %v436, %v391
      %v516 = vmul.f32 %v439, %v392
      %v517 = vmul.f32 %v442, %v391
      %v518 = vmul.f32 %v445, %v392
      %v519 = vmul.f32 %v448, %v391
      %v520 = vmul.f32 %v451, %v392
      %v521 = vsel %vm468, %v513, 0.0
      %v522 = vsel %vm468, %v514, 0.0
      %v523 = vadd.f32 %v521, %v522
      %v524 = vrot.slane %v523, 4
      %v525 = vadd.f32 %v523, %v524
      %v526 = vrot.slane %v525, 2
      %v527 = vadd.f32 %v525, %v526
      %v528 = vrot.slane %v527, 1
      %v529 = vadd.f32 %v527, %v528
      %v530 = vsel %vm468, %v515, 0.0
      %v531 = vsel %vm468, %v516, 0.0
      %v532 = vadd.f32 %v530, %v531
      %v533 = vrot.slane %v532, 4
      %v534 = vadd.f32 %v532, %v533
      %v535 = vrot.slane %v534, 2
      %v536 = vadd.f32 %v534, %v535
      %v537 = vrot.slane %v536, 1
      %v538 = vadd.f32 %v536, %v537
      %v539 = vsel %vm468, %v517, 0.0
      %v540 = vsel %vm468, %v518, 0.0
      %v541 = vadd.f32 %v539, %v540
      %v542 = vrot.slane %v541, 4
      %v543 = vadd.f32 %v541, %v542
      %v544 = vrot.slane %v543, 2
      %v545 = vadd.f32 %v543, %v544
      %v546 = vrot.slane %v545, 1
      %v547 = vadd.f32 %v545, %v546
      %v548 = vsel %vm468, %v519, 0.0
      %v549 = vsel %vm468, %v520, 0.0
      %v550 = vadd.f32 %v548, %v549
      %v551 = vrot.slane %v550, 4
      %v552 = vadd.f32 %v550, %v551
      %v553 = vrot.slane %v552, 2
      %v554 = vadd.f32 %v552, %v553
      %v555 = vrot.slane %v554, 1
      %v556 = vadd.f32 %v554, %v555
      %v557 = vadd.f32 %v529, %v393
      %v558 = vadd.f32 %v538, %v393
      %v559 = vadd.f32 %v547, %v393
      %v560 = vadd.f32 %v556, %v393
      %v561 = vmax.f32 %v557, 0.0
      %v562 = vmax.f32 %v558, 0.0
      %v563 = vmax.f32 %v559, 0.0
      %v564 = vmax.f32 %v560, 0.0
      %v565 = vadd.f32 %v509, %v561
      %v566 = vadd.f32 %v510, %v562
      %v567 = vadd.f32 %v511, %v563
      %v568 = vadd.f32 %v512, %v564
      %v569 = vmul.f32 %v452, %v391
      %v570 = vmul.f32 %v453, %v392
      %v571 = vmul.f32 %v454, %v391
      %v572 = vmul.f32 %v455, %v392
      %v573 = vmul.f32 %v456, %v391
      %v574 = vmul.f32 %v457, %v392
      %v575 = vmul.f32 %v458, %v391
      %v576 = vmul.f32 %v459, %v392
      %v577 = vsel %vm468, %v569, 0.0
      %v578 = vsel %vm468, %v570, 0.0
      %v579 = vadd.f32 %v577, %v578
      %v580 = vrot.slane %v579, 4
      %v581 = vadd.f32 %v579, %v580
      %v582 = vrot.slane %v581, 2
      %v583 = vadd.f32 %v581, %v582
      %v584 = vrot.slane %v583, 1
      %v585 = vadd.f32 %v583, %v584
      %v586 = vsel %vm468, %v571, 0.0
      %v587 = vsel %vm468, %v572, 0.0
      %v588 = vadd.f32 %v586, %v587
      %v589 = vrot.slane %v588, 4
      %v590 = vadd.f32 %v588, %v589
      %v591 = vrot.slane %v590, 2
      %v592 = vadd.f32 %v590, %v591
      %v593 = vrot.slane %v592, 1
      %v594 = vadd.f32 %v592, %v593
      %v595 = vsel %vm468, %v573, 0.0
      %v596 = vsel %vm468, %v574, 0.0
      %v597 = vadd.f32 %v595, %v596
      %v598 = vrot.slane %v597, 4
      %v599 = vadd.f32 %v597, %v598
      %v600 = vrot.slane %v599, 2
      %v601 = vadd.f32 %v599, %v600
      %v602 = vrot.slane %v601, 1
      %v603 = vadd.f32 %v601, %v602
      %v604 = vsel %vm468, %v575, 0.0
      %v605 = vsel %vm468, %v576, 0.0
      %v606 = vadd.f32 %v604, %v605
      %v607 = vrot.slane %v606, 4
      %v608 = vadd.f32 %v606, %v607
      %v609 = vrot.slane %v608, 2
      %v610 = vadd.f32 %v608, %v609
      %v611 = vrot.slane %v610, 1
      %v612 = vadd.f32 %v610, %v611
      %v613 = vadd.f32 %v585, %v393
      %v614 = vadd.f32 %v594, %v393
      %v615 = vadd.f32 %v603, %v393
      %v616 = vadd.f32 %v612, %v393
      %v617 = vmax.f32 %v613, 0.0
      %v618 = vmax.f32 %v614, 0.0
      %v619 = vmax.f32 %v615, 0.0
      %v620 = vmax.f32 %v616, 0.0
      %v621 = vadd.f32 %v565, %v617
      %v622 = vadd.f32 %v566, %v618
      %v623 = vadd.f32 %v567, %v619
      %v624 = vadd.f32 %v568, %v620
      %v625 = vld [vmem:[%s5] sm:$0xff]
      %v626 = vld [vmem:[%s5 + $0x8] sm:$0xff]
      %v627 = vlaneseq
      %v628 = vshrl.u32 %v627, 7
      %v629 = vsub.s32 0, %v628
      %v630 = vrot.slane %v621, %v629
      %v631 = vlaneseq
      %v632 = vshrl.u32 %v631, 7
      %v633 = vsub.s32 0, %v632
      %v634 = vrot.slane %v622, %v633
      %v635 = vlaneseq
      %v636 = vshrl.u32 %v635, 7
      %v637 = vsub.s32 0, %v636
      %v638 = vrot.slane %v623, %v637
      %v639 = vlaneseq
      %v640 = vshrl.u32 %v639, 7
      %v641 = vsub.s32 0, %v640
      %v642 = vrot.slane %v624, %v641
      %v643 = vmul.f32 %v625, %v630
      %v644 = vmul.f32 %v626, %v630
      %v645 = vmul.f32 %v625, %v634
      %v646 = vmul.f32 %v626, %v634
      %v647 = vmul.f32 %v625, %v638
      %v648 = vmul.f32 %v626, %v638
      %v649 = vmul.f32 %v625, %v642
      %v650 = vmul.f32 %v626, %v642
      %v651 = vadd.f32 %v643, 0.0
      %v652 = vadd.f32 %v644, 0.0
      %v653 = vadd.f32 %v645, 0.0
      %v654 = vadd.f32 %v646, 0.0
      %v655 = vadd.f32 %v647, 0.0
      %v656 = vadd.f32 %v648, 0.0
      %v657 = vadd.f32 %v649, 0.0
      %v658 = vadd.f32 %v650, 0.0
      %v659 = vld [vmem:[%s6] sm:$0xff]
      %v660 = vld [vmem:[%s6 + $0x8] sm:$0xff]
      %v661 = vmul.f32 %v659, 3.0
      %v662 = vmul.f32 %v660, 3.0
      %v663 = vadd.f32 %v651, %v661
      %v664 = vadd.f32 %v652, %v662
      %v665 = vadd.f32 %v653, %v661
      %v666 = vadd.f32 %v654, %v662
      %v667 = vadd.f32 %v655, %v661
      %v668 = vadd.f32 %v656, %v662
      %v669 = vadd.f32 %v657, %v661
      %v670 = vadd.f32 %v658, %v662
      %v671 = vxor.u32 %v663, 2147483648
      %v672 = vxor.u32 %v664, 2147483648
      %v673 = vxor.u32 %v665, 2147483648
      %v674 = vxor.u32 %v666, 2147483648
      %v675 = vxor.u32 %v667, 2147483648
      %v676 = vxor.u32 %v668, 2147483648
      %v677 = vxor.u32 %v669, 2147483648
      %v678 = vxor.u32 %v670, 2147483648
      %v679 = vmul.f32 %v671, 1.442695
      %v680 = vpow.pop %v679
      %v681 = vmul.f32 %v672, 1.442695
      %v682 = vpow.pop %v681
      %v683 = vmul.f32 %v673, 1.442695
      %v684 = vpow.pop %v683
      %v685 = vmul.f32 %v674, 1.442695
      %v686 = vpow.pop %v685
      %v687 = vmul.f32 %v675, 1.442695
      %v688 = vpow.pop %v687
      %v689 = vmul.f32 %v676, 1.442695
      %v690 = vpow.pop %v689
      %v691 = vmul.f32 %v677, 1.442695
      %v692 = vpow.pop %v691
      %v693 = vmul.f32 %v678, 1.442695
      %v694 = vpow.pop %v693
      %v695 = vadd.f32 %v680, 1.0
      %v696 = vadd.f32 %v682, 1.0
      %v697 = vadd.f32 %v684, 1.0
      %v698 = vadd.f32 %v686, 1.0
      %v699 = vadd.f32 %v688, 1.0
      %v700 = vadd.f32 %v690, 1.0
      %v701 = vadd.f32 %v692, 1.0
      %v702 = vadd.f32 %v694, 1.0
      %v703 = vrcp.pop %v695
      %v704 = vmul.f32 1.0, %v703
      %v705 = vrcp.pop %v696
      %v706 = vmul.f32 1.0, %v705
      %v707 = vrcp.pop %v697
      %v708 = vmul.f32 1.0, %v707
      %v709 = vrcp.pop %v698
      %v710 = vmul.f32 1.0, %v709
      %v711 = vrcp.pop %v699
      %v712 = vmul.f32 1.0, %v711
      %v713 = vrcp.pop %v700
      %v714 = vmul.f32 1.0, %v713
      %v715 = vrcp.pop %v701
      %v716 = vmul.f32 1.0, %v715
      %v717 = vrcp.pop %v702
      %v718 = vmul.f32 1.0, %v717
      %720 = vset.pattern.permute.xlu0 0
      %721 = vperm.xlu0 %720, %v704
      %v722 = vpop.permute.xlu0 %721
      %725 = vset.pattern.permute.xlu0 0
      %726 = vperm.xlu0 %725, %v706
      %v727 = vpop.permute.xlu0 %726
      %730 = vset.pattern.permute.xlu0 0
      %731 = vperm.xlu0 %730, %v708
      %v732 = vpop.permute.xlu0 %731
      %735 = vset.pattern.permute.xlu0 0
      %736 = vperm.xlu0 %735, %v710
      %v737 = vpop.permute.xlu0 %736
      %740 = vset.pattern.permute.xlu0 0
      %741 = vperm.xlu0 %740, %v712
      %v742 = vpop.permute.xlu0 %741
      %745 = vset.pattern.permute.xlu0 0
      %746 = vperm.xlu0 %745, %v714
      %v747 = vpop.permute.xlu0 %746
      %750 = vset.pattern.permute.xlu0 0
      %751 = vperm.xlu0 %750, %v716
      %v752 = vpop.permute.xlu0 %751
      %755 = vset.pattern.permute.xlu0 0
      %756 = vperm.xlu0 %755, %v718
      %v757 = vpop.permute.xlu0 %756
      %v759 = vmul.f32 %v383, %v722
      %v760 = vmul.f32 %v384, %v727
      %v761 = vmul.f32 %v385, %v732
      %v762 = vmul.f32 %v386, %v737
      %v763 = vmul.f32 %v387, %v742
      %v764 = vmul.f32 %v388, %v747
      %v765 = vmul.f32 %v389, %v752
      %v766 = vmul.f32 %v390, %v757
      %767 = vst.msk [vmem:[%s378] sm:$0xff] %vm394, %v759
      %768 = vst.msk [vmem:[%s378 + $0x8] sm:$0xff] %vm394, %v760
      %769 = vst.msk [vmem:[%s378 + $0x10] sm:$0xff] %vm394, %v761
      %770 = vst.msk [vmem:[%s378 + $0x18] sm:$0xff] %vm394, %v762
      %771 = vst.msk [vmem:[%s378 + $0x20] sm:$0xff] %vm394, %v763
      %772 = vst.msk [vmem:[%s378 + $0x28] sm:$0xff] %vm394, %v764
      %773 = vst.msk [vmem:[%s378 + $0x30] sm:$0xff] %vm394, %v765
      %774 = vst.msk [vmem:[%s378 + $0x38] sm:$0xff] %vm394, %v766
      %v775 = vsel %vm394, %v759, -inf
      %v776 = vsel %vm394, %v760, -inf
      %v777 = vmax.f32 %v775, %v776
      %v778 = vrot.slane %v777, 4
      %v779 = vmax.f32 %v777, %v778
      %v780 = vrot.slane %v779, 2
      %v781 = vmax.f32 %v779, %v780
      %v782 = vrot.slane %v781, 1
      %v783 = vmax.f32 %v781, %v782
      %v784 = vsel %vm394, %v761, -inf
      %v785 = vsel %vm394, %v762, -inf
      %v786 = vmax.f32 %v784, %v785
      %v787 = vrot.slane %v786, 4
      %v788 = vmax.f32 %v786, %v787
      %v789 = vrot.slane %v788, 2
      %v790 = vmax.f32 %v788, %v789
      %v791 = vrot.slane %v790, 1
      %v792 = vmax.f32 %v790, %v791
      %v793 = vsel %vm394, %v763, -inf
      %v794 = vsel %vm394, %v764, -inf
      %v795 = vmax.f32 %v793, %v794
      %v796 = vrot.slane %v795, 4
      %v797 = vmax.f32 %v795, %v796
      %v798 = vrot.slane %v797, 2
      %v799 = vmax.f32 %v797, %v798
      %v800 = vrot.slane %v799, 1
      %v801 = vmax.f32 %v799, %v800
      %v802 = vsel %vm394, %v765, -inf
      %v803 = vsel %vm394, %v766, -inf
      %v804 = vmax.f32 %v802, %v803
      %v805 = vrot.slane %v804, 4
      %v806 = vmax.f32 %v804, %v805
      %v807 = vrot.slane %v806, 2
      %v808 = vmax.f32 %v806, %v807
      %v809 = vrot.slane %v808, 1
      %v810 = vmax.f32 %v808, %v809
      %v811 = vsel %vm394, %v759, 0.0
      %v812 = vsel %vm394, %v760, 0.0
      %v813 = vadd.f32 %v811, %v812
      %v814 = vrot.slane %v813, 4
      %v815 = vadd.f32 %v813, %v814
      %v816 = vrot.slane %v815, 2
      %v817 = vadd.f32 %v815, %v816
      %v818 = vrot.slane %v817, 1
      %v819 = vadd.f32 %v817, %v818
      %v820 = vsel %vm394, %v761, 0.0
      %v821 = vsel %vm394, %v762, 0.0
      %v822 = vadd.f32 %v820, %v821
      %v823 = vrot.slane %v822, 4
      %v824 = vadd.f32 %v822, %v823
      %v825 = vrot.slane %v824, 2
      %v826 = vadd.f32 %v824, %v825
      %v827 = vrot.slane %v826, 1
      %v828 = vadd.f32 %v826, %v827
      %v829 = vsel %vm394, %v763, 0.0
      %v830 = vsel %vm394, %v764, 0.0
      %v831 = vadd.f32 %v829, %v830
      %v832 = vrot.slane %v831, 4
      %v833 = vadd.f32 %v831, %v832
      %v834 = vrot.slane %v833, 2
      %v835 = vadd.f32 %v833, %v834
      %v836 = vrot.slane %v835, 1
      %v837 = vadd.f32 %v835, %v836
      %v838 = vsel %vm394, %v765, 0.0
      %v839 = vsel %vm394, %v766, 0.0
      %v840 = vadd.f32 %v838, %v839
      %v841 = vrot.slane %v840, 4
      %v842 = vadd.f32 %v840, %v841
      %v843 = vrot.slane %v842, 2
      %v844 = vadd.f32 %v842, %v843
      %v845 = vrot.slane %v844, 1
      %v846 = vadd.f32 %v844, %v845
      %v847 = vrcp.pop 16.0
      %v848 = vmul.f32 %v819, %v847
      %v849 = vmul.f32 %v828, %v847
      %v850 = vmul.f32 %v837, %v847
      %v851 = vmul.f32 %v846, %v847
      %v852 = vld [vmem:[%s7] sm:$0xff]
      %v853 = vld [vmem:[%s7 + $0x8] sm:$0xff]
      %v854 = vld [vmem:[%s7 + $0x10] sm:$0xff]
      %v855 = vld [vmem:[%s7 + $0x18] sm:$0xff]
      %v856 = vld [vmem:[%s7 + $0x20] sm:$0xff]
      %v857 = vld [vmem:[%s7 + $0x28] sm:$0xff]
      %v858 = vld [vmem:[%s7 + $0x30] sm:$0xff]
      %v859 = vld [vmem:[%s7 + $0x38] sm:$0xff]
      %s860 = scalar_lea.vmem %s7, 64
      %v861 = vld [vmem:[%s860] sm:$0xff]
      %v862 = vld [vmem:[%s860 + $0x8] sm:$0xff]
      %v863 = vld [vmem:[%s860 + $0x10] sm:$0xff]
      %v864 = vld [vmem:[%s860 + $0x18] sm:$0xff]
      %v865 = vld [vmem:[%s860 + $0x20] sm:$0xff]
      %v866 = vld [vmem:[%s860 + $0x28] sm:$0xff]
      %v867 = vld [vmem:[%s860 + $0x30] sm:$0xff]
      %v868 = vld [vmem:[%s860 + $0x38] sm:$0xff]
      %vm873 = vcmask 1041409
      %v874 = vsel %vm873, %v849, %v848
      %vm875 = vcmask 1042434
      %v876 = vsel %vm875, %v850, %v874
      %vm877 = vcmask 1043459
      %v878 = vsel %vm877, %v851, %v876
      %v879 = vsel %vm394, %v878, 0
      %881 = vmatprep.subr.mxu0 0.0
      %882 = vmatpush1.msra.mxu0 %v861
      %883 = vmatprep.subr.mxu0 0.0
      %884 = vmatpush1.msra.mxu0 %v862
      %885 = vmatprep.subr.mxu0 0.0
      %886 = vmatpush1.msra.mxu0 %v863
      %887 = vmatprep.subr.mxu0 0.0
      %888 = vmatpush1.msra.mxu0 %v864
      %889 = vmatprep.subr.mxu0 0.0
      %890 = vmatpush1.msra.mxu0 %v865
      %891 = vmatprep.subr.mxu0 0.0
      %892 = vmatpush1.msra.mxu0 %v866
      %893 = vmatprep.subr.mxu0 0.0
      %894 = vmatpush1.msra.mxu0 %v867
      %895 = vmatprep.subr.mxu0 0.0
      %896 = vmatpush1.msra.mxu0 %v868
      %897 = vmatprep.subr.mxu0 0.0
      %898 = vmatpush1.msra.mxu0 0.0
      %899 = vmatprep.subr.mxu0 0.0
      %900 = vmatpush1.msra.mxu0 0.0
      %901 = vmatprep.subr.mxu0 0.0
      %902 = vmatpush1.msra.mxu0 0.0
      %903 = vmatprep.subr.mxu0 0.0
      %904 = vmatpush1.msra.mxu0 0.0
      %905 = vmatprep.subr.mxu0 0.0
      %906 = vmatpush1.msra.mxu0 0.0
      %907 = vmatprep.subr.mxu0 0.0
      %908 = vmatpush1.msra.mxu0 0.0
      %909 = vmatprep.subr.mxu0 0.0
      %910 = vmatpush1.msra.mxu0 0.0
      %911 = vmatprep.subr.mxu0 0.0
      %912 = vmatpush1.msra.mxu0 0.0
      %913 = vmatprep.subr.mxu0 0.0
      %914 = vmatpush1.msra.mxu0 0.0
      %915 = vmatprep.subr.mxu0 0.0
      %916 = vmatpush1.msra.mxu0 0.0
      %917 = vmatprep.subr.mxu0 0.0
      %918 = vmatpush1.msra.mxu0 0.0
      %919 = vmatprep.subr.mxu0 0.0
      %920 = vmatpush1.msra.mxu0 0.0
      %921 = vmatprep.subr.mxu0 0.0
      %922 = vmatpush1.msra.mxu0 0.0
      %923 = vmatprep.subr.mxu0 0.0
      %924 = vmatpush1.msra.mxu0 0.0
      %925 = vmatprep.subr.mxu0 0.0
      %926 = vmatpush1.msra.mxu0 0.0
      %927 = vmatprep.subr.mxu0 0.0
      %928 = vmatpush1.msra.mxu0 0.0
      %929 = vmatprep.subr.mxu0 0.0
      %930 = vmatpush1.msra.mxu0 0.0
      %931 = vmatprep.subr.mxu0 0.0
      %932 = vmatpush1.msra.mxu0 0.0
      %933 = vmatprep.subr.mxu0 0.0
      %934 = vmatpush1.msra.mxu0 0.0
      %935 = vmatprep.subr.mxu0 0.0
      %936 = vmatpush1.msra.mxu0 0.0
      %937 = vmatprep.subr.mxu0 0.0
      %938 = vmatpush1.msra.mxu0 0.0
      %939 = vmatprep.subr.mxu0 0.0
      %940 = vmatpush1.msra.mxu0 0.0
      %941 = vmatprep.subr.mxu0 0.0
      %942 = vmatpush1.msra.mxu0 0.0
      %943 = vmatprep.subr.mxu0 0.0
      %944 = vmatpush1.msra.mxu0 0.0
      %945 = vmatprep.mubr.f32.mxu0 0.0
      %946 = vmatmul.mubr.f32.gmra.mrb[0].mxu0 %v879
      %v947 = vpop.f32.mrb[0].mxu0
      %v948 = vadd.f32 0.0, %v947
      %v949 = vpop.f32.mrb[0].mxu0
      %950 = vdwg.mxu0
      %v955 = vsel %vm873, %v792, %v783
      %v956 = vsel %vm875, %v801, %v955
      %v957 = vsel %vm877, %v810, %v956
      %v958 = vsel %vm394, %v957, 0
      %960 = vmatprep.subr.mxu0 0.0
      %961 = vmatpush1.msra.mxu0 %v852
      %962 = vmatprep.subr.mxu0 0.0
      %963 = vmatpush1.msra.mxu0 %v853
      %964 = vmatprep.subr.mxu0 0.0
      %965 = vmatpush1.msra.mxu0 %v854
      %966 = vmatprep.subr.mxu0 0.0
      %967 = vmatpush1.msra.mxu0 %v855
      %968 = vmatprep.subr.mxu0 0.0
      %969 = vmatpush1.msra.mxu0 %v856
      %970 = vmatprep.subr.mxu0 0.0
      %971 = vmatpush1.msra.mxu0 %v857
      %972 = vmatprep.subr.mxu0 0.0
      %973 = vmatpush1.msra.mxu0 %v858
      %974 = vmatprep.subr.mxu0 0.0
      %975 = vmatpush1.msra.mxu0 %v859
      %976 = vmatprep.subr.mxu0 0.0
      %977 = vmatpush1.msra.mxu0 0.0
      %978 = vmatprep.subr.mxu0 0.0
      %979 = vmatpush1.msra.mxu0 0.0
      %980 = vmatprep.subr.mxu0 0.0
      %981 = vmatpush1.msra.mxu0 0.0
      %982 = vmatprep.subr.mxu0 0.0
      %983 = vmatpush1.msra.mxu0 0.0
      %984 = vmatprep.subr.mxu0 0.0
      %985 = vmatpush1.msra.mxu0 0.0
      %986 = vmatprep.subr.mxu0 0.0
      %987 = vmatpush1.msra.mxu0 0.0
      %988 = vmatprep.subr.mxu0 0.0
      %989 = vmatpush1.msra.mxu0 0.0
      %990 = vmatprep.subr.mxu0 0.0
      %991 = vmatpush1.msra.mxu0 0.0
      %992 = vmatprep.subr.mxu0 0.0
      %993 = vmatpush1.msra.mxu0 0.0
      %994 = vmatprep.subr.mxu0 0.0
      %995 = vmatpush1.msra.mxu0 0.0
      %996 = vmatprep.subr.mxu0 0.0
      %997 = vmatpush1.msra.mxu0 0.0
      %998 = vmatprep.subr.mxu0 0.0
      %999 = vmatpush1.msra.mxu0 0.0
      %1000 = vmatprep.subr.mxu0 0.0
      %1001 = vmatpush1.msra.mxu0 0.0
      %1002 = vmatprep.subr.mxu0 0.0
      %1003 = vmatpush1.msra.mxu0 0.0
      %1004 = vmatprep.subr.mxu0 0.0
      %1005 = vmatpush1.msra.mxu0 0.0
      %1006 = vmatprep.subr.mxu0 0.0
      %1007 = vmatpush1.msra.mxu0 0.0
      %1008 = vmatprep.subr.mxu0 0.0
      %1009 = vmatpush1.msra.mxu0 0.0
      %1010 = vmatprep.subr.mxu0 0.0
      %1011 = vmatpush1.msra.mxu0 0.0
      %1012 = vmatprep.subr.mxu0 0.0
      %1013 = vmatpush1.msra.mxu0 0.0
      %1014 = vmatprep.subr.mxu0 0.0
      %1015 = vmatpush1.msra.mxu0 0.0
      %1016 = vmatprep.subr.mxu0 0.0
      %1017 = vmatpush1.msra.mxu0 0.0
      %1018 = vmatprep.subr.mxu0 0.0
      %1019 = vmatpush1.msra.mxu0 0.0
      %1020 = vmatprep.subr.mxu0 0.0
      %1021 = vmatpush1.msra.mxu0 0.0
      %1022 = vmatprep.subr.mxu0 0.0
      %1023 = vmatpush1.msra.mxu0 0.0
      %1024 = vmatprep.mubr.f32.mxu0 0.0
      %1025 = vmatmul.mubr.f32.gmra.mrb[0].mxu0 %v958
      %v1026 = vpop.f32.mrb[0].mxu0
      %v1027 = vadd.f32 %v948, %v1026
      %v1028 = vpop.f32.mrb[0].mxu0
      %1029 = vdwg.mxu0
      %v1030 = vld [vmem:[%s373] sm:$0xf]
      %s1031 = scalar_lea.vmem %s7, 128
      %v1032 = vld [vmem:[%s1031] sm:$0xff]
      %v1033 = vld [vmem:[%s1031 + $0x8] sm:$0xff]
      %v1034 = vld [vmem:[%s1031 + $0x10] sm:$0xff]
      %v1035 = vld [vmem:[%s1031 + $0x18] sm:$0xff]
      %v1036 = vld [vmem:[%s1031 + $0x20] sm:$0xff]
      %v1037 = vld [vmem:[%s1031 + $0x28] sm:$0xff]
      %v1038 = vld [vmem:[%s1031 + $0x30] sm:$0xff]
      %v1039 = vld [vmem:[%s1031 + $0x38] sm:$0xff]
      %v1041 = vsel %vm394, %v1030, 0
      %1043 = vmatprep.subr.mxu0 0.0
      %1044 = vmatpush1.msra.mxu0 %v1032
      %1045 = vmatprep.subr.mxu0 0.0
      %1046 = vmatpush1.msra.mxu0 %v1033
      %1047 = vmatprep.subr.mxu0 0.0
      %1048 = vmatpush1.msra.mxu0 %v1034
      %1049 = vmatprep.subr.mxu0 0.0
      %1050 = vmatpush1.msra.mxu0 %v1035
      %1051 = vmatprep.subr.mxu0 0.0
      %1052 = vmatpush1.msra.mxu0 %v1036
      %1053 = vmatprep.subr.mxu0 0.0
      %1054 = vmatpush1.msra.mxu0 %v1037
      %1055 = vmatprep.subr.mxu0 0.0
      %1056 = vmatpush1.msra.mxu0 %v1038
      %1057 = vmatprep.subr.mxu0 0.0
      %1058 = vmatpush1.msra.mxu0 %v1039
      %1059 = vmatprep.subr.mxu0 0.0
      %1060 = vmatpush1.msra.mxu0 0.0
      %1061 = vmatprep.subr.mxu0 0.0
      %1062 = vmatpush1.msra.mxu0 0.0
      %1063 = vmatprep.subr.mxu0 0.0
      %1064 = vmatpush1.msra.mxu0 0.0
      %1065 = vmatprep.subr.mxu0 0.0
      %1066 = vmatpush1.msra.mxu0 0.0
      %1067 = vmatprep.subr.mxu0 0.0
      %1068 = vmatpush1.msra.mxu0 0.0
      %1069 = vmatprep.subr.mxu0 0.0
      %1070 = vmatpush1.msra.mxu0 0.0
      %1071 = vmatprep.subr.mxu0 0.0
      %1072 = vmatpush1.msra.mxu0 0.0
      %1073 = vmatprep.subr.mxu0 0.0
      %1074 = vmatpush1.msra.mxu0 0.0
      %1075 = vmatprep.subr.mxu0 0.0
      %1076 = vmatpush1.msra.mxu0 0.0
      %1077 = vmatprep.subr.mxu0 0.0
      %1078 = vmatpush1.msra.mxu0 0.0
      %1079 = vmatprep.subr.mxu0 0.0
      %1080 = vmatpush1.msra.mxu0 0.0
      %1081 = vmatprep.subr.mxu0 0.0
      %1082 = vmatpush1.msra.mxu0 0.0
      %1083 = vmatprep.subr.mxu0 0.0
      %1084 = vmatpush1.msra.mxu0 0.0
      %1085 = vmatprep.subr.mxu0 0.0
      %1086 = vmatpush1.msra.mxu0 0.0
      %1087 = vmatprep.subr.mxu0 0.0
      %1088 = vmatpush1.msra.mxu0 0.0
      %1089 = vmatprep.subr.mxu0 0.0
      %1090 = vmatpush1.msra.mxu0 0.0
      %1091 = vmatprep.subr.mxu0 0.0
      %1092 = vmatpush1.msra.mxu0 0.0
      %1093 = vmatprep.subr.mxu0 0.0
      %1094 = vmatpush1.msra.mxu0 0.0
      %1095 = vmatprep.subr.mxu0 0.0
      %1096 = vmatpush1.msra.mxu0 0.0
      %1097 = vmatprep.subr.mxu0 0.0
      %1098 = vmatpush1.msra.mxu0 0.0
      %1099 = vmatprep.subr.mxu0 0.0
      %1100 = vmatpush1.msra.mxu0 0.0
      %1101 = vmatprep.subr.mxu0 0.0
      %1102 = vmatpush1.msra.mxu0 0.0
      %1103 = vmatprep.subr.mxu0 0.0
      %1104 = vmatpush1.msra.mxu0 0.0
      %1105 = vmatprep.subr.mxu0 0.0
      %1106 = vmatpush1.msra.mxu0 0.0
      %1107 = vmatprep.mubr.f32.mxu0 0.0
      %1108 = vmatmul.mubr.f32.gmra.mrb[0].mxu0 %v1041
      %v1109 = vpop.f32.mrb[0].mxu0
      %v1110 = vadd.f32 0.0, %v1109
      %v1111 = vpop.f32.mrb[0].mxu0
      %1112 = vdwg.mxu0
      %v1113 = vadd.f32 %v1027, %v1110
      %vm1114 = vcmask 519168
      %1115 = vst.msk [vmem:[%s382] sm:$0xf] %vm1114, %v1113
      %p1116 = scmp.lt.s32.totalorder %s23, 1
      %s1117 = scalar_select %p1116, %s23, 1
      %s1118 = smul.addr %s1117, 8
      %s1119 = smul.addr %s1118, 8
      %s1120 = scalar_lea.vmem %s8, %s1119
      %p1121 = scmp.lt.s32.totalorder %s23, 1
      %s1122 = scalar_select %p1121, %s23, 1
      %s1123 = smul.addr %s1122, 4
      %s1124 = scalar_lea.vmem %s9, %s1123
      // Predicated region
      $region53: #{tab_attention_forward.2} parent=51 // pred_check
        %p1125 = pneg %p224
      $region54: #{tab_attention_forward.2} parent=51 // pred_check_branch
        %1127 = sbr.rel (%p1125) target = $region56
      $region55: #{tab_attention_forward.2} parent=51 // pred_region
        _
      $region56: #{tab_attention_forward.2} parent=51 // pred_fallthru
        _
      // Predicated region
      $region57: #{tab_attention_forward.2} parent=51 // pred_check
        %p1128 = pneg %p250
      $region58: #{tab_attention_forward.2} parent=51 // pred_check_branch
        %1130 = sbr.rel (%p1128) target = $region60
      $region59: #{tab_attention_forward.2} parent=51 // pred_region
        _
      $region60: #{tab_attention_forward.2} parent=51 // pred_fallthru
        _
    $region52: #{tab_attention_forward.2} parent=5 // pred_fallthru
      _
    %p1131 = scmp.le.s32.totalorder 2, %s18
    // Predicated region
    $region61: #{tab_attention_forward.2} parent=5 // pred_check
      %p1132 = pneg %p1131
    $region62: #{tab_attention_forward.2} parent=5 // pred_check_branch
      %1134 = sbr.rel (%p1132) target = $region64
    $region63: #{tab_attention_forward.2} parent=5 // pred_region
      %s1135 = ssub.s32 %s18, 2
      // Predicated region
      $region65: #{tab_attention_forward.2} parent=63 // pred_check
        %p1136 = pneg %p230
      $region66: #{tab_attention_forward.2} parent=63 // pred_check_branch
        %1138 = sbr.rel (%p1136) target = $region68
      $region67: #{tab_attention_forward.2} parent=63 // pred_region
        %p1139 = scmp.lt.s32.totalorder %s24, 1
        %s1140 = scalar_select %p1139, %s24, 1
        %s1141 = smul.addr %s1140, 8
        %s1142 = smul.addr %s1141, 8
        %s1143 = scalar_lea.vmem %s8, %s1142
      $region68: #{tab_attention_forward.2} parent=63 // pred_fallthru
        _
      // Predicated region
      $region69: #{tab_attention_forward.2} parent=63 // pred_check
        %p1144 = pneg %p256
      $region70: #{tab_attention_forward.2} parent=63 // pred_check_branch
        %1146 = sbr.rel (%p1144) target = $region72
      $region71: #{tab_attention_forward.2} parent=63 // pred_region
        %p1147 = scmp.lt.s32.totalorder %s24, 1
        %s1148 = scalar_select %p1147, %s24, 1
        %s1149 = smul.addr %s1148, 4
        %s1150 = scalar_lea.vmem %s9, %s1149
      $region72: #{tab_attention_forward.2} parent=63 // pred_fallthru
        _
    $region64: #{tab_attention_forward.2} parent=5 // pred_fallthru
      _
  $region6: #{tab_attention_forward.2} parent=0 // loop_footer
    %s22 = sadd.s32 1, %s18
  $region7: #{tab_attention_forward.2} parent=0 // loop_footer_branch
    %17 = sbr.rel target = $region3
  $region8: #{tab_attention_forward.2} parent=0 // loop_exit
    _

</llo_original>
